<compile_context>
chip_gen: v7x
topology: tpu7x:2x2x1
jax: 0.10.0
libtpu: 0.0.40
codegen_flags: <defaults>
</compile_context>

<pallas_src>
import functools

import jax
import jax.numpy as jnp
from jax.experimental import pallas as pl
from jax.experimental.pallas import tpu as pltpu


# ---------------------------------------------------------------------------
# Kernel
# ---------------------------------------------------------------------------
def _actor_kernel(obs_ref,
                  w1f_ref, b1f_ref, w2bd_ref, b2f_ref,
                  w0f_ref, w0b_ref, b0ih_ref, whh0_ref, b0hh_ref,
                  w1A_ref, w1C_ref, b1ih_ref, whh1_ref, b1hh_ref,
                  w3A_ref, w3C_ref, b3_ref,
                  out_ref, *, act_dim, h2, act_limit):
    T = act_dim
    tb = obs_ref.shape[0]
    f32 = jnp.float32

    def mm(x, w_ref):
        # bf16 (or f32) operands, f32 MXU accumulation.
        w = w_ref[...]
        return jnp.dot(x.astype(w.dtype), w, preferred_element_type=f32)

    def sigmoid(x):
        # EUP-friendly form (exact): sigmoid(x) = 0.5 * (tanh(x/2) + 1)
        return 0.5 * (jnp.tanh(0.5 * x) + 1.0)

    # ---- fused per-action-dim MLP encoders (ReLU) -------------------------
    obs = obs_ref[...]
    a1 = jnp.maximum(mm(obs, w1f_ref) + b1f_ref[...], 0.0)        # [tb, T*h1]
    xsp = jnp.maximum(mm(a1, w2bd_ref) + b2f_ref[...], 0.0)       # [tb, T*h2]

    # stack the sequence timestep-major: X[s*tb:(s+1)*tb] = xs[s]
    xs = [xsp[:, t * h2:(t + 1) * h2] for t in range(T)]          # T x [tb, h2]
    X = jnp.concatenate(xs, axis=0)                               # [T*tb, h2]
    Xr = jnp.concatenate(xs[::-1], axis=0)                        # time-reversed

    # Paired bidirectional recurrence: hidden state is [tb, 2*h2] = [fwd | bwd],
    # gate lanes are gate-major / direction-minor: [r_f r_b z_f z_b n_f n_b].
    def birnn_layer(gx_all, whh_ref, bhh_ref):
        whh = whh_ref[...]
        bhh = bhh_ref[...]
        h = jnp.zeros((tb, 2 * h2), f32)
        outs = []
        for s in range(T):                                        # unrolled (T static)
            g = gx_all[s * tb:(s + 1) * tb, :]                    # [tb, 6*h2]
            gh = jnp.dot(h.astype(whh.dtype), whh,
                         preferred_element_type=f32) + bhh        # ONE dot / step
            r = sigmoid(g[:, 0:2 * h2] + gh[:, 0:2 * h2])
            z = sigmoid(g[:, 2 * h2:4 * h2] + gh[:, 2 * h2:4 * h2])
            n = jnp.tanh(g[:, 4 * h2:6 * h2] + r * gh[:, 4 * h2:6 * h2])
            h = (1.0 - z) * n + z * h
            outs.append(h)
        return outs

    # ---- layer-0 bi-GRU: all input projections hoisted out of the loop ----
    g0 = mm(X, w0f_ref) + mm(Xr, w0b_ref) + b0ih_ref[...]         # [T*tb, 6*h2]
    h0 = birnn_layer(g0, whh0_ref, b0hh_ref)
    P = jnp.concatenate(h0, axis=0)                               # [T*tb, 2*h2]
    Pr = jnp.concatenate(h0[::-1], axis=0)

    # ---- layer-1 bi-GRU ----------------------------------------------------
    g1 = mm(P, w1A_ref) + mm(Pr, w1C_ref) + b1ih_ref[...]         # [T*tb, 6*h2]
    h1s = birnn_layer(g1, whh1_ref, b1hh_ref)
    Q = jnp.concatenate(h1s, axis=0)                              # [T*tb, 2*h2]
    Qr = jnp.concatenate(h1s[::-1], axis=0)

    # ---- heads: one small matmul + diagonal-block extraction ---------------
    Z = (jnp.dot(Q, w3A_ref[...], preferred_element_type=f32)
         + jnp.dot(Qr, w3C_ref[...], preferred_element_type=f32))  # [T*tb, T]
    lane = jax.lax.broadcasted_iota(jnp.int32, (1, T), 1)
    y = jnp.zeros((tb, T), f32)
    for j in range(T):
        y = y + Z[j * tb:(j + 1) * tb, :] * (lane == j).astype(f32)
    y = y + b3_ref[...]
    out_ref[...] = (act_limit * jnp.tanh(y)).astype(out_ref.dtype)


_PARAM_ORDER = ("w1f", "b1f", "w2bd", "b2f",
                "w0f", "w0b", "b0ih", "whh0", "b0hh",
                "w1A", "w1C", "b1ih", "whh1", "b1hh",
                "w3A", "w3C", "b3")


def _round_up(x, m):
    return ((x + m - 1) // m) * m


def _cdiv(a, b):
    return (a + b - 1) // b


def _choose_tile_b(batch, tile_b_max=512):
    """Multiple-of-8 tile that minimizes padding; >=2 tiles when >=16 rows (v7x)."""
    b8 = _round_up(max(batch, 1), 8)
    if b8 >= 16:
        cap = min(_round_up(tile_b_max, 8), _round_up(_cdiv(b8, 2), 8))
    else:
        cap = 8
    n_tiles = max(1, _cdiv(b8, cap))
    tile_b = _round_up(_cdiv(b8, n_tiles), 8)
    pad_b = _round_up(b8, tile_b)
    return tile_b, pad_b


def decoupled_birnn_actor_forward(obs, kp, act_limit, *, tile_b_max=512):
    """obs: [B, obs_dim] f32 -> [B, act_dim] f32 = act_limit * pi(obs)."""
    batch, obs_dim = obs.shape
    act_dim = kp["b3"].shape[1]
    h2 = kp["whh0"].shape[0] // 2
    h1 = kp["w2bd"].shape[0] // act_dim

    tile_b, pad_b = _choose_tile_b(batch, tile_b_max)
    if pad_b != batch:
        obs = jnp.pad(obs, ((0, pad_b - batch), (0, 0)))

    plist = [kp[k] for k in _PARAM_ORDER]

    def resident(a):
        # Same block index every grid step -> stays VMEM-resident (no re-DMA).
        return pl.BlockSpec(a.shape, lambda i, _nd=a.ndim: (0,) * _nd)

    in_specs = [pl.BlockSpec((tile_b, obs_dim), lambda i: (i, 0))]
    in_specs += [resident(a) for a in plist]
    out_spec = pl.BlockSpec((tile_b, act_dim), lambda i: (i, 0))

    # Advisory cost estimate.
    seq = act_dim
    flops = pad_b * (2 * obs_dim * seq * h1
                     + 2 * seq * h1 * seq * h2
                     + 2 * 2 * seq * h2 * 6 * h2          # layer-0 gx
                     + 2 * seq * 2 * h2 * 6 * h2          # layer-0 recurrence
                     + 2 * 2 * seq * 2 * h2 * 6 * h2      # layer-1 gx
                     + 2 * seq * 2 * h2 * 6 * h2          # layer-1 recurrence
                     + 2 * 2 * seq * 2 * h2 * seq)        # heads
    transcendentals = pad_b * (2 * seq * 6 * h2 + seq)
    weight_bytes = sum(int(p.size) * p.dtype.itemsize for p in plist)
    bytes_accessed = 4 * pad_b * (obs_dim + act_dim) + weight_bytes

    # VMEM budget (v7x has 64 MiB physical): resident weights + in-flight
    # f32 intermediates + double-buffered obs/out tiles, with slack.
    interm_bytes = 4 * tile_b * seq * (h1 + 3 * h2 + 4 * 6 * h2 + 8 * h2 + 2 * seq)
    vmem_limit = int(min(max(3 * interm_bytes + 4 * weight_bytes
                             + 16 * tile_b * (obs_dim + act_dim), 32 << 20),
                         64 << 20))

    kernel = functools.partial(_actor_kernel, act_dim=act_dim, h2=h2,
                               act_limit=float(act_limit))
    out = pl.pallas_call(
        kernel,
        out_shape=jax.ShapeDtypeStruct((pad_b, act_dim), jnp.float32),
        grid=(pad_b // tile_b,),
        in_specs=in_specs,
        out_specs=out_spec,
        compiler_params=pltpu.CompilerParams(
            dimension_semantics=("parallel",),
            vmem_limit_bytes=vmem_limit),
        cost_estimate=pl.CostEstimate(flops=int(flops),
                                      transcendentals=int(transcendentals),
                                      bytes_accessed=int(bytes_accessed)),
    )(obs, *plist)
    return out[:batch]


# ---------------------------------------------------------------------------
# Parameters: PyTorch-layout init + fused/packed kernel layout
# ---------------------------------------------------------------------------
def init_params(key, obs_dim, act_dim, hidden_sizes):
    """PyTorch-layout parameters with the module's initializers.

    Linear: U(-1/sqrt(fan_in), 1/sqrt(fan_in)) (weight [out, in], bias [out]);
    every GRU parameter: U(-0.1, 0.1); GRU gate order (r, z, n).
    """
    h1, h2 = hidden_sizes

    def uni(k, shape, bound):
        return jax.random.uniform(k, shape, jnp.float32, -bound, bound)

    ks = iter(jax.random.split(key, 14))
    p = {}
    p["l1_w"] = uni(next(ks), (act_dim, h1, obs_dim), obs_dim ** -0.5)
    p["l1_b"] = uni(next(ks), (act_dim, h1), obs_dim ** -0.5)
    p["l2_w"] = uni(next(ks), (act_dim, h2, h1), h1 ** -0.5)
    p["l2_b"] = uni(next(ks), (act_dim, h2), h1 ** -0.5)
    p["gru_wih_l0"] = uni(next(ks), (2, 3 * h2, h2), 0.1)       # [dir, 3*h2, in]
    p["gru_whh_l0"] = uni(next(ks), (2, 3 * h2, h2), 0.1)
    p["gru_bih_l0"] = uni(next(ks), (2, 3 * h2), 0.1)
    p["gru_bhh_l0"] = uni(next(ks), (2, 3 * h2), 0.1)
    p["gru_wih_l1"] = uni(next(ks), (2, 3 * h2, 2 * h2), 0.1)
    p["gru_whh_l1"] = uni(next(ks), (2, 3 * h2, h2), 0.1)
    p["gru_bih_l1"] = uni(next(ks), (2, 3 * h2), 0.1)
    p["gru_bhh_l1"] = uni(next(ks), (2, 3 * h2), 0.1)
    p["l3_w"] = uni(next(ks), (act_dim, 1, 2 * h2), (2 * h2) ** -0.5)
    p["l3_b"] = uni(next(ks), (act_dim, 1), (2 * h2) ** -0.5)
    return p


def prepare_params(pt, obs_dim, act_dim, hidden_sizes, matmul_dtype=jnp.bfloat16):
    """Build the fused / lane-packed kernel weights from PyTorch-layout params."""
    T = act_dim
    h1, h2 = hidden_sizes
    f32 = jnp.float32
    mm_dt = matmul_dtype

    def block_diag(blocks):
        rows = sum(b.shape[0] for b in blocks)
        cols = sum(b.shape[1] for b in blocks)
        out = jnp.zeros((rows, cols), f32)
        r = c = 0
        for b in blocks:
            out = out.at[r:r + b.shape[0], c:c + b.shape[1]].set(b)
            r += b.shape[0]
            c += b.shape[1]
        return out

    # Gate-lane layout used by the kernel: blocks of width h2, gate-major /
    # direction-minor: [r_f, r_b, z_f, z_b, n_f, n_b].
    def blk(g, d):
        b = 2 * g + d
        return slice(b * h2, (b + 1) * h2)

    kp = {}
    # fused per-dim MLP
    kp["w1f"] = jnp.concatenate([pt["l1_w"][i].T for i in range(T)], axis=1).astype(mm_dt)
    kp["b1f"] = jnp.concatenate([pt["l1_b"][i] for i in range(T)], axis=0)[None, :]
    kp["w2bd"] = block_diag([pt["l2_w"][i].T for i in range(T)]).astype(mm_dt)
    kp["b2f"] = jnp.concatenate([pt["l2_b"][i] for i in range(T)], axis=0)[None, :]

    def spread_ih_l0(d):
        out = jnp.zeros((h2, 6 * h2), f32)
        w = pt["gru_wih_l0"][d]                                  # [3*h2, h2]
        for g in range(3):
            out = out.at[:, blk(g, d)].set(w[g * h2:(g + 1) * h2, :].T)
        return out

    def pair_bias(bname, layer):
        out = jnp.zeros((6 * h2,), f32)
        for d in range(2):
            b = pt[f"{bname}_l{layer}"][d]                       # [3*h2]
            for g in range(3):
                out = out.at[blk(g, d)].set(b[g * h2:(g + 1) * h2])
        return out[None, :]

    def pair_whh(layer):
        out = jnp.zeros((2 * h2, 6 * h2), f32)
        for d in range(2):
            w = pt[f"gru_whh_l{layer}"][d]                       # [3*h2, h2]
            for g in range(3):
                out = out.at[d * h2:(d + 1) * h2, blk(g, d)].set(
                    w[g * h2:(g + 1) * h2, :].T)
        return out

    kp["w0f"] = spread_ih_l0(0).astype(mm_dt)
    kp["w0b"] = spread_ih_l0(1).astype(mm_dt)
    kp["b0ih"] = pair_bias("gru_bih", 0)
    kp["whh0"] = pair_whh(0).astype(mm_dt)
    kp["b0hh"] = pair_bias("gru_bhh", 0)

    # layer-1 input projections split over the two stacked operands:
    #   G1 = P @ w1A + Pr @ w1C, P[s] = H0[s] = [f0[s] | r0[T-1-s]], Pr = reversed.
    A = jnp.zeros((2 * h2, 6 * h2), f32)
    C = jnp.zeros((2 * h2, 6 * h2), f32)
    for g in range(3):
        wf = pt["gru_wih_l1"][0][g * h2:(g + 1) * h2, :]         # [h2, 2*h2]
        wb = pt["gru_wih_l1"][1][g * h2:(g + 1) * h2, :]
        # forward direction at pair-step s consumes x1[s] = [f0[s] | r0[s]]
        A = A.at[0:h2, blk(g, 0)].set(wf[:, 0:h2].T)             # f0[s]     in P[:, :h2]
        C = C.at[h2:2 * h2, blk(g, 0)].set(wf[:, h2:2 * h2].T)   # r0[s]     in Pr[:, h2:]
        # backward direction at pair-step s consumes x1[T-1-s]
        C = C.at[0:h2, blk(g, 1)].set(wb[:, 0:h2].T)             # f0[T-1-s] in Pr[:, :h2]
        A = A.at[h2:2 * h2, blk(g, 1)].set(wb[:, h2:2 * h2].T)   # r0[T-1-s] in P[:, h2:]
    kp["w1A"] = A.astype(mm_dt)
    kp["w1C"] = C.astype(mm_dt)
    kp["b1ih"] = pair_bias("gru_bih", 1)
    kp["whh1"] = pair_whh(1).astype(mm_dt)
    kp["b1hh"] = pair_bias("gru_bhh", 1)

    # heads: Z = Q @ w3A + Qr @ w3C, y[:, j] = Z[j*tb:(j+1)*tb, j]  (f32, tiny)
    w3A = jnp.zeros((2 * h2, T), f32)
    w3C = jnp.zeros((2 * h2, T), f32)
    for j in range(T):
        w3A = w3A.at[0:h2, j].set(pt["l3_w"][j][0, 0:h2])
        w3C = w3C.at[h2:2 * h2, j].set(pt["l3_w"][j][0, h2:2 * h2])
    kp["w3A"] = w3A
    kp["w3C"] = w3C
    kp["b3"] = pt["l3_b"][:, 0][None, :]
    return kp


# ---------------------------------------------------------------------------
# Pure-jnp reference (direct mirror of the PyTorch forward, f32)
# ---------------------------------------------------------------------------
def reference_forward(obs, pt, act_limit):
    act_dim = pt["l1_w"].shape[0]
    h2 = pt["l2_w"].shape[1]
    sig = lambda v: 1.0 / (1.0 + jnp.exp(-v))

    seq = []
    for i in range(act_dim):
        h = jnp.maximum(obs @ pt["l1_w"][i].T + pt["l1_b"][i], 0.0)
        h = jnp.maximum(h @ pt["l2_w"][i].T + pt["l2_b"][i], 0.0)
        seq.append(h)

    def gru_dir(xs_list, wih, whh, bih, bhh, reverse):
        T = len(xs_list)
        B = xs_list[0].shape[0]
        h = jnp.zeros((B, h2), jnp.float32)
        outs = [None] * T
        order = range(T - 1, -1, -1) if reverse else range(T)
        for t in order:
            gi = xs_list[t] @ wih.T + bih
            gh = h @ whh.T + bhh
            r = sig(gi[:, :h2] + gh[:, :h2])
            z = sig(gi[:, h2:2 * h2] + gh[:, h2:2 * h2])
            n = jnp.tanh(gi[:, 2 * h2:] + r * gh[:, 2 * h2:])
            h = (1.0 - z) * n + z * h
            outs[t] = h
        return outs

    def bigru_layer(xs_list, layer):
        f = gru_dir(xs_list, pt[f"gru_wih_l{layer}"][0], pt[f"gru_whh_l{layer}"][0],
                    pt[f"gru_bih_l{layer}"][0], pt[f"gru_bhh_l{layer}"][0], reverse=False)
        b = gru_dir(xs_list, pt[f"gru_wih_l{layer}"][1], pt[f"gru_whh_l{layer}"][1],
                    pt[f"gru_bih_l{layer}"][1], pt[f"gru_bhh_l{layer}"][1], reverse=True)
        return [jnp.concatenate([f[t], b[t]], axis=-1) for t in range(len(xs_list))]

    out0 = bigru_layer(seq, 0)
    out1 = bigru_layer(out0, 1)

    cols = [jnp.tanh(out1[j] @ pt["l3_w"][j].T + pt["l3_b"][j]) for j in range(act_dim)]
    return act_limit * jnp.concatenate(cols, axis=1)


if __name__ == "__main__":
    obs_dim, act_dim = 16, 4
    hidden_sizes = (32, 32)
    act_limit = 2.0
    batch = 2

    key = jax.random.PRNGKey(0)
    key, k_obs = jax.random.split(key)
    pt_params = init_params(key, obs_dim, act_dim, hidden_sizes)
    obs = jax.random.normal(k_obs, (batch, obs_dim), jnp.float32)

    ref = reference_forward(obs, pt_params, act_limit)

    # shipping config: bf16 MXU operands, f32 accumulation / elementwise
    kp_bf16 = prepare_params(pt_params, obs_dim, act_dim, hidden_sizes,
                             matmul_dtype=jnp.bfloat16)
    out = jax.block_until_ready(decoupled_birnn_actor_forward(obs, kp_bf16, act_limit))
    assert out.shape == (batch, act_dim)
    # bf16 inputs -> tolerance relaxed vs. the pure-f32 reference.
    assert jnp.allclose(out, ref, atol=3e-2, rtol=3e-2), (out, ref)

    # same kernel with f32 matmul operands: checks the fused-weight bookkeeping
    # exactly against the PyTorch-layout f32 reference.
    kp_f32 = prepare_params(pt_params, obs_dim, act_dim, hidden_sizes,
                            matmul_dtype=jnp.float32)
    out32 = jax.block_until_ready(decoupled_birnn_actor_forward(obs, kp_f32, act_limit))
    assert jnp.allclose(out32, ref, atol=1e-3, rtol=1e-3), (out32, ref)

    print("KERNEL_OK")
</pallas_src>

<mosaic_0001>
module attributes {stable_mosaic.version = 11 : i64} {
  func.func @_actor_kernel(%arg0: i32, %arg1: memref<8x16xf32, #tpu.memory_space<vmem>>, %arg2: memref<16x128xbf16, #tpu.memory_space<vmem>>, %arg3: memref<1x128xf32, #tpu.memory_space<vmem>>, %arg4: memref<128x128xbf16, #tpu.memory_space<vmem>>, %arg5: memref<1x128xf32, #tpu.memory_space<vmem>>, %arg6: memref<32x192xbf16, #tpu.memory_space<vmem>>, %arg7: memref<32x192xbf16, #tpu.memory_space<vmem>>, %arg8: memref<1x192xf32, #tpu.memory_space<vmem>>, %arg9: memref<64x192xbf16, #tpu.memory_space<vmem>>, %arg10: memref<1x192xf32, #tpu.memory_space<vmem>>, %arg11: memref<64x192xbf16, #tpu.memory_space<vmem>>, %arg12: memref<64x192xbf16, #tpu.memory_space<vmem>>, %arg13: memref<1x192xf32, #tpu.memory_space<vmem>>, %arg14: memref<64x192xbf16, #tpu.memory_space<vmem>>, %arg15: memref<1x192xf32, #tpu.memory_space<vmem>>, %arg16: memref<64x4xf32, #tpu.memory_space<vmem>>, %arg17: memref<64x4xf32, #tpu.memory_space<vmem>>, %arg18: memref<1x4xf32, #tpu.memory_space<vmem>>, %arg19: memref<8x4xf32, #tpu.memory_space<vmem>>) attributes {dimension_semantics = [#tpu.dimension_semantics<parallel>], iteration_bounds = array<i64: 1>, scalar_prefetch = 0 : i64, scratch_operands = 0 : i64, tpu.core_type = #tpu.core_type<tc>, window_params = [{transform_indices = @transform_0, window_bounds = array<i64: 8, 16>}, {pipeline_mode = #tpu.pipeline_mode<synchronous>, transform_indices = @transform_1, window_bounds = array<i64: 16, 128>}, {pipeline_mode = #tpu.pipeline_mode<synchronous>, transform_indices = @transform_2, window_bounds = array<i64: 1, 128>}, {pipeline_mode = #tpu.pipeline_mode<synchronous>, transform_indices = @transform_3, window_bounds = array<i64: 128, 128>}, {pipeline_mode = #tpu.pipeline_mode<synchronous>, transform_indices = @transform_4, window_bounds = array<i64: 1, 128>}, {pipeline_mode = #tpu.pipeline_mode<synchronous>, transform_indices = @transform_5, window_bounds = array<i64: 32, 192>}, {pipeline_mode = #tpu.pipeline_mode<synchronous>, transform_indices = @transform_6, window_bounds = array<i64: 32, 192>}, {pipeline_mode = #tpu.pipeline_mode<synchronous>, transform_indices = @transform_7, window_bounds = array<i64: 1, 192>}, {pipeline_mode = #tpu.pipeline_mode<synchronous>, transform_indices = @transform_8, window_bounds = array<i64: 64, 192>}, {pipeline_mode = #tpu.pipeline_mode<synchronous>, transform_indices = @transform_9, window_bounds = array<i64: 1, 192>}, {pipeline_mode = #tpu.pipeline_mode<synchronous>, transform_indices = @transform_10, window_bounds = array<i64: 64, 192>}, {pipeline_mode = #tpu.pipeline_mode<synchronous>, transform_indices = @transform_11, window_bounds = array<i64: 64, 192>}, {pipeline_mode = #tpu.pipeline_mode<synchronous>, transform_indices = @transform_12, window_bounds = array<i64: 1, 192>}, {pipeline_mode = #tpu.pipeline_mode<synchronous>, transform_indices = @transform_13, window_bounds = array<i64: 64, 192>}, {pipeline_mode = #tpu.pipeline_mode<synchronous>, transform_indices = @transform_14, window_bounds = array<i64: 1, 192>}, {pipeline_mode = #tpu.pipeline_mode<synchronous>, transform_indices = @transform_15, window_bounds = array<i64: 64, 4>}, {pipeline_mode = #tpu.pipeline_mode<synchronous>, transform_indices = @transform_16, window_bounds = array<i64: 64, 4>}, {pipeline_mode = #tpu.pipeline_mode<synchronous>, transform_indices = @transform_17, window_bounds = array<i64: 1, 4>}, {transform_indices = @transform_18, window_bounds = array<i64: 8, 4>}]} {
    %c0 = arith.constant 0 : index
    %c0_0 = arith.constant 0 : index
    %0 = vector.load %arg1[%c0, %c0_0] : memref<8x16xf32, #tpu.memory_space<vmem>>, vector<8x16xf32>
    %c0_1 = arith.constant 0 : index
    %c0_2 = arith.constant 0 : index
    %1 = vector.load %arg2[%c0_1, %c0_2] : memref<16x128xbf16, #tpu.memory_space<vmem>>, vector<16x128xbf16>
    %2 = arith.truncf %0 : vector<8x16xf32> to vector<8x16xbf16>
    %cst = arith.constant dense<0.000000e+00> : vector<8x128xf32>
    %3 = tpu.matmul %2, %1, %cst {dimension_numbers = #tpu.dot_dimension_numbers<[1], [0], [0], [1], [0, 0, 1, 1], [], []>} : vector<8x16xbf16>, vector<16x128xbf16>, vector<8x128xf32> -> vector<8x128xf32>
    %c0_3 = arith.constant 0 : index
    %c0_4 = arith.constant 0 : index
    %4 = vector.load %arg3[%c0_3, %c0_4] : memref<1x128xf32, #tpu.memory_space<vmem>>, vector<1x128xf32>
    %5 = vector.broadcast %4 : vector<1x128xf32> to vector<8x128xf32>
    %6 = arith.addf %3, %5 : vector<8x128xf32>
    %cst_5 = arith.constant 0.000000e+00 : f32
    %7 = vector.broadcast %cst_5 : f32 to vector<8x128xf32>
    %8 = arith.maximumf %6, %7 : vector<8x128xf32>
    %c0_6 = arith.constant 0 : index
    %c0_7 = arith.constant 0 : index
    %9 = vector.load %arg4[%c0_6, %c0_7] : memref<128x128xbf16, #tpu.memory_space<vmem>>, vector<128x128xbf16>
    %10 = arith.truncf %8 : vector<8x128xf32> to vector<8x128xbf16>
    %cst_8 = arith.constant dense<0.000000e+00> : vector<8x128xf32>
    %11 = tpu.matmul %10, %9, %cst_8 {dimension_numbers = #tpu.dot_dimension_numbers<[1], [0], [0], [1], [0, 0, 1, 1], [], []>} : vector<8x128xbf16>, vector<128x128xbf16>, vector<8x128xf32> -> vector<8x128xf32>
    %c0_9 = arith.constant 0 : index
    %c0_10 = arith.constant 0 : index
    %12 = vector.load %arg5[%c0_9, %c0_10] : memref<1x128xf32, #tpu.memory_space<vmem>>, vector<1x128xf32>
    %13 = vector.broadcast %12 : vector<1x128xf32> to vector<8x128xf32>
    %14 = arith.addf %11, %13 : vector<8x128xf32>
    %cst_11 = arith.constant 0.000000e+00 : f32
    %15 = vector.broadcast %cst_11 : f32 to vector<8x128xf32>
    %16 = arith.maximumf %14, %15 : vector<8x128xf32>
    %17 = vector.extract_strided_slice %16 {offsets = [0, 0], sizes = [8, 32], strides = [1, 1]} : vector<8x128xf32> to vector<8x32xf32>
    %18 = vector.extract_strided_slice %16 {offsets = [0, 32], sizes = [8, 32], strides = [1, 1]} : vector<8x128xf32> to vector<8x32xf32>
    %19 = vector.extract_strided_slice %16 {offsets = [0, 64], sizes = [8, 32], strides = [1, 1]} : vector<8x128xf32> to vector<8x32xf32>
    %20 = vector.extract_strided_slice %16 {offsets = [0, 96], sizes = [8, 32], strides = [1, 1]} : vector<8x128xf32> to vector<8x32xf32>
    %21 = tpu.concatenate %17, %18, %19, %20 in 0 : vector<8x32xf32>, vector<8x32xf32>, vector<8x32xf32>, vector<8x32xf32> -> vector<32x32xf32>
    %22 = tpu.concatenate %20, %19, %18, %17 in 0 : vector<8x32xf32>, vector<8x32xf32>, vector<8x32xf32>, vector<8x32xf32> -> vector<32x32xf32>
    %c0_12 = arith.constant 0 : index
    %c0_13 = arith.constant 0 : index
    %23 = vector.load %arg6[%c0_12, %c0_13] : memref<32x192xbf16, #tpu.memory_space<vmem>>, vector<32x192xbf16>
    %24 = arith.truncf %21 : vector<32x32xf32> to vector<32x32xbf16>
    %cst_14 = arith.constant dense<0.000000e+00> : vector<32x192xf32>
    %25 = tpu.matmul %24, %23, %cst_14 {dimension_numbers = #tpu.dot_dimension_numbers<[1], [0], [0], [1], [0, 0, 1, 1], [], []>} : vector<32x32xbf16>, vector<32x192xbf16>, vector<32x192xf32> -> vector<32x192xf32>
    %c0_15 = arith.constant 0 : index
    %c0_16 = arith.constant 0 : index
    %26 = vector.load %arg7[%c0_15, %c0_16] : memref<32x192xbf16, #tpu.memory_space<vmem>>, vector<32x192xbf16>
    %27 = arith.truncf %22 : vector<32x32xf32> to vector<32x32xbf16>
    %cst_17 = arith.constant dense<0.000000e+00> : vector<32x192xf32>
    %28 = tpu.matmul %27, %26, %cst_17 {dimension_numbers = #tpu.dot_dimension_numbers<[1], [0], [0], [1], [0, 0, 1, 1], [], []>} : vector<32x32xbf16>, vector<32x192xbf16>, vector<32x192xf32> -> vector<32x192xf32>
    %29 = arith.addf %25, %28 : vector<32x192xf32>
    %c0_18 = arith.constant 0 : index
    %c0_19 = arith.constant 0 : index
    %30 = vector.load %arg8[%c0_18, %c0_19] : memref<1x192xf32, #tpu.memory_space<vmem>>, vector<1x192xf32>
    %31 = vector.broadcast %30 : vector<1x192xf32> to vector<32x192xf32>
    %32 = arith.addf %29, %31 : vector<32x192xf32>
    %c0_20 = arith.constant 0 : index
    %c0_21 = arith.constant 0 : index
    %33 = vector.load %arg9[%c0_20, %c0_21] : memref<64x192xbf16, #tpu.memory_space<vmem>>, vector<64x192xbf16>
    %c0_22 = arith.constant 0 : index
    %c0_23 = arith.constant 0 : index
    %34 = vector.load %arg10[%c0_22, %c0_23] : memref<1x192xf32, #tpu.memory_space<vmem>>, vector<1x192xf32>
    %cst_24 = arith.constant 0.000000e+00 : f32
    %35 = vector.broadcast %cst_24 : f32 to vector<8x64xf32>
    %36 = vector.extract_strided_slice %32 {offsets = [0, 0], sizes = [8, 192], strides = [1, 1]} : vector<32x192xf32> to vector<8x192xf32>
    %37 = arith.truncf %35 : vector<8x64xf32> to vector<8x64xbf16>
    %cst_25 = arith.constant dense<0.000000e+00> : vector<8x192xf32>
    %38 = tpu.matmul %37, %33, %cst_25 {dimension_numbers = #tpu.dot_dimension_numbers<[1], [0], [0], [1], [0, 0, 1, 1], [], []>} : vector<8x64xbf16>, vector<64x192xbf16>, vector<8x192xf32> -> vector<8x192xf32>
    %39 = vector.broadcast %34 : vector<1x192xf32> to vector<8x192xf32>
    %40 = arith.addf %38, %39 : vector<8x192xf32>
    %41 = vector.extract_strided_slice %36 {offsets = [0, 0], sizes = [8, 64], strides = [1, 1]} : vector<8x192xf32> to vector<8x64xf32>
    %42 = vector.extract_strided_slice %40 {offsets = [0, 0], sizes = [8, 64], strides = [1, 1]} : vector<8x192xf32> to vector<8x64xf32>
    %43 = arith.addf %41, %42 : vector<8x64xf32>
    %cst_26 = arith.constant 5.000000e-01 : f32
    %44 = vector.broadcast %cst_26 : f32 to vector<8x64xf32>
    %45 = arith.mulf %44, %43 : vector<8x64xf32>
    %46 = math.tanh %45 : vector<8x64xf32>
    %cst_27 = arith.constant 1.000000e+00 : f32
    %47 = vector.broadcast %cst_27 : f32 to vector<8x64xf32>
    %48 = arith.addf %46, %47 : vector<8x64xf32>
    %cst_28 = arith.constant 5.000000e-01 : f32
    %49 = vector.broadcast %cst_28 : f32 to vector<8x64xf32>
    %50 = arith.mulf %49, %48 : vector<8x64xf32>
    %51 = vector.extract_strided_slice %36 {offsets = [0, 64], sizes = [8, 64], strides = [1, 1]} : vector<8x192xf32> to vector<8x64xf32>
    %52 = vector.extract_strided_slice %40 {offsets = [0, 64], sizes = [8, 64], strides = [1, 1]} : vector<8x192xf32> to vector<8x64xf32>
    %53 = arith.addf %51, %52 : vector<8x64xf32>
    %cst_29 = arith.constant 5.000000e-01 : f32
    %54 = vector.broadcast %cst_29 : f32 to vector<8x64xf32>
    %55 = arith.mulf %54, %53 : vector<8x64xf32>
    %56 = math.tanh %55 : vector<8x64xf32>
    %cst_30 = arith.constant 1.000000e+00 : f32
    %57 = vector.broadcast %cst_30 : f32 to vector<8x64xf32>
    %58 = arith.addf %56, %57 : vector<8x64xf32>
    %cst_31 = arith.constant 5.000000e-01 : f32
    %59 = vector.broadcast %cst_31 : f32 to vector<8x64xf32>
    %60 = arith.mulf %59, %58 : vector<8x64xf32>
    %61 = vector.extract_strided_slice %36 {offsets = [0, 128], sizes = [8, 64], strides = [1, 1]} : vector<8x192xf32> to vector<8x64xf32>
    %62 = vector.extract_strided_slice %40 {offsets = [0, 128], sizes = [8, 64], strides = [1, 1]} : vector<8x192xf32> to vector<8x64xf32>
    %63 = arith.mulf %50, %62 : vector<8x64xf32>
    %64 = arith.addf %61, %63 : vector<8x64xf32>
    %65 = math.tanh %64 : vector<8x64xf32>
    %cst_32 = arith.constant 1.000000e+00 : f32
    %66 = vector.broadcast %cst_32 : f32 to vector<8x64xf32>
    %67 = arith.subf %66, %60 : vector<8x64xf32>
    %68 = arith.mulf %67, %65 : vector<8x64xf32>
    %69 = arith.mulf %60, %35 : vector<8x64xf32>
    %70 = arith.addf %68, %69 : vector<8x64xf32>
    %71 = vector.extract_strided_slice %32 {offsets = [8, 0], sizes = [8, 192], strides = [1, 1]} : vector<32x192xf32> to vector<8x192xf32>
    %72 = arith.truncf %70 : vector<8x64xf32> to vector<8x64xbf16>
    %cst_33 = arith.constant dense<0.000000e+00> : vector<8x192xf32>
    %73 = tpu.matmul %72, %33, %cst_33 {dimension_numbers = #tpu.dot_dimension_numbers<[1], [0], [0], [1], [0, 0, 1, 1], [], []>} : vector<8x64xbf16>, vector<64x192xbf16>, vector<8x192xf32> -> vector<8x192xf32>
    %74 = vector.broadcast %34 : vector<1x192xf32> to vector<8x192xf32>
    %75 = arith.addf %73, %74 : vector<8x192xf32>
    %76 = vector.extract_strided_slice %71 {offsets = [0, 0], sizes = [8, 64], strides = [1, 1]} : vector<8x192xf32> to vector<8x64xf32>
    %77 = vector.extract_strided_slice %75 {offsets = [0, 0], sizes = [8, 64], strides = [1, 1]} : vector<8x192xf32> to vector<8x64xf32>
    %78 = arith.addf %76, %77 : vector<8x64xf32>
    %cst_34 = arith.constant 5.000000e-01 : f32
    %79 = vector.broadcast %cst_34 : f32 to vector<8x64xf32>
    %80 = arith.mulf %79, %78 : vector<8x64xf32>
    %81 = math.tanh %80 : vector<8x64xf32>
    %cst_35 = arith.constant 1.000000e+00 : f32
    %82 = vector.broadcast %cst_35 : f32 to vector<8x64xf32>
    %83 = arith.addf %81, %82 : vector<8x64xf32>
    %cst_36 = arith.constant 5.000000e-01 : f32
    %84 = vector.broadcast %cst_36 : f32 to vector<8x64xf32>
    %85 = arith.mulf %84, %83 : vector<8x64xf32>
    %86 = vector.extract_strided_slice %71 {offsets = [0, 64], sizes = [8, 64], strides = [1, 1]} : vector<8x192xf32> to vector<8x64xf32>
    %87 = vector.extract_strided_slice %75 {offsets = [0, 64], sizes = [8, 64], strides = [1, 1]} : vector<8x192xf32> to vector<8x64xf32>
    %88 = arith.addf %86, %87 : vector<8x64xf32>
    %cst_37 = arith.constant 5.000000e-01 : f32
    %89 = vector.broadcast %cst_37 : f32 to vector<8x64xf32>
    %90 = arith.mulf %89, %88 : vector<8x64xf32>
    %91 = math.tanh %90 : vector<8x64xf32>
    %cst_38 = arith.constant 1.000000e+00 : f32
    %92 = vector.broadcast %cst_38 : f32 to vector<8x64xf32>
    %93 = arith.addf %91, %92 : vector<8x64xf32>
    %cst_39 = arith.constant 5.000000e-01 : f32
    %94 = vector.broadcast %cst_39 : f32 to vector<8x64xf32>
    %95 = arith.mulf %94, %93 : vector<8x64xf32>
    %96 = vector.extract_strided_slice %71 {offsets = [0, 128], sizes = [8, 64], strides = [1, 1]} : vector<8x192xf32> to vector<8x64xf32>
    %97 = vector.extract_strided_slice %75 {offsets = [0, 128], sizes = [8, 64], strides = [1, 1]} : vector<8x192xf32> to vector<8x64xf32>
    %98 = arith.mulf %85, %97 : vector<8x64xf32>
    %99 = arith.addf %96, %98 : vector<8x64xf32>
    %100 = math.tanh %99 : vector<8x64xf32>
    %cst_40 = arith.constant 1.000000e+00 : f32
    %101 = vector.broadcast %cst_40 : f32 to vector<8x64xf32>
    %102 = arith.subf %101, %95 : vector<8x64xf32>
    %103 = arith.mulf %102, %100 : vector<8x64xf32>
    %104 = arith.mulf %95, %70 : vector<8x64xf32>
    %105 = arith.addf %103, %104 : vector<8x64xf32>
    %106 = vector.extract_strided_slice %32 {offsets = [16, 0], sizes = [8, 192], strides = [1, 1]} : vector<32x192xf32> to vector<8x192xf32>
    %107 = arith.truncf %105 : vector<8x64xf32> to vector<8x64xbf16>
    %cst_41 = arith.constant dense<0.000000e+00> : vector<8x192xf32>
    %108 = tpu.matmul %107, %33, %cst_41 {dimension_numbers = #tpu.dot_dimension_numbers<[1], [0], [0], [1], [0, 0, 1, 1], [], []>} : vector<8x64xbf16>, vector<64x192xbf16>, vector<8x192xf32> -> vector<8x192xf32>
    %109 = vector.broadcast %34 : vector<1x192xf32> to vector<8x192xf32>
    %110 = arith.addf %108, %109 : vector<8x192xf32>
    %111 = vector.extract_strided_slice %106 {offsets = [0, 0], sizes = [8, 64], strides = [1, 1]} : vector<8x192xf32> to vector<8x64xf32>
    %112 = vector.extract_strided_slice %110 {offsets = [0, 0], sizes = [8, 64], strides = [1, 1]} : vector<8x192xf32> to vector<8x64xf32>
    %113 = arith.addf %111, %112 : vector<8x64xf32>
    %cst_42 = arith.constant 5.000000e-01 : f32
    %114 = vector.broadcast %cst_42 : f32 to vector<8x64xf32>
    %115 = arith.mulf %114, %113 : vector<8x64xf32>
    %116 = math.tanh %115 : vector<8x64xf32>
    %cst_43 = arith.constant 1.000000e+00 : f32
    %117 = vector.broadcast %cst_43 : f32 to vector<8x64xf32>
    %118 = arith.addf %116, %117 : vector<8x64xf32>
    %cst_44 = arith.constant 5.000000e-01 : f32
    %119 = vector.broadcast %cst_44 : f32 to vector<8x64xf32>
    %120 = arith.mulf %119, %118 : vector<8x64xf32>
    %121 = vector.extract_strided_slice %106 {offsets = [0, 64], sizes = [8, 64], strides = [1, 1]} : vector<8x192xf32> to vector<8x64xf32>
    %122 = vector.extract_strided_slice %110 {offsets = [0, 64], sizes = [8, 64], strides = [1, 1]} : vector<8x192xf32> to vector<8x64xf32>
    %123 = arith.addf %121, %122 : vector<8x64xf32>
    %cst_45 = arith.constant 5.000000e-01 : f32
    %124 = vector.broadcast %cst_45 : f32 to vector<8x64xf32>
    %125 = arith.mulf %124, %123 : vector<8x64xf32>
    %126 = math.tanh %125 : vector<8x64xf32>
    %cst_46 = arith.constant 1.000000e+00 : f32
    %127 = vector.broadcast %cst_46 : f32 to vector<8x64xf32>
    %128 = arith.addf %126, %127 : vector<8x64xf32>
    %cst_47 = arith.constant 5.000000e-01 : f32
    %129 = vector.broadcast %cst_47 : f32 to vector<8x64xf32>
    %130 = arith.mulf %129, %128 : vector<8x64xf32>
    %131 = vector.extract_strided_slice %106 {offsets = [0, 128], sizes = [8, 64], strides = [1, 1]} : vector<8x192xf32> to vector<8x64xf32>
    %132 = vector.extract_strided_slice %110 {offsets = [0, 128], sizes = [8, 64], strides = [1, 1]} : vector<8x192xf32> to vector<8x64xf32>
    %133 = arith.mulf %120, %132 : vector<8x64xf32>
    %134 = arith.addf %131, %133 : vector<8x64xf32>
    %135 = math.tanh %134 : vector<8x64xf32>
    %cst_48 = arith.constant 1.000000e+00 : f32
    %136 = vector.broadcast %cst_48 : f32 to vector<8x64xf32>
    %137 = arith.subf %136, %130 : vector<8x64xf32>
    %138 = arith.mulf %137, %135 : vector<8x64xf32>
    %139 = arith.mulf %130, %105 : vector<8x64xf32>
    %140 = arith.addf %138, %139 : vector<8x64xf32>
    %141 = vector.extract_strided_slice %32 {offsets = [24, 0], sizes = [8, 192], strides = [1, 1]} : vector<32x192xf32> to vector<8x192xf32>
    %142 = arith.truncf %140 : vector<8x64xf32> to vector<8x64xbf16>
    %cst_49 = arith.constant dense<0.000000e+00> : vector<8x192xf32>
    %143 = tpu.matmul %142, %33, %cst_49 {dimension_numbers = #tpu.dot_dimension_numbers<[1], [0], [0], [1], [0, 0, 1, 1], [], []>} : vector<8x64xbf16>, vector<64x192xbf16>, vector<8x192xf32> -> vector<8x192xf32>
    %144 = vector.broadcast %34 : vector<1x192xf32> to vector<8x192xf32>
    %145 = arith.addf %143, %144 : vector<8x192xf32>
    %146 = vector.extract_strided_slice %141 {offsets = [0, 0], sizes = [8, 64], strides = [1, 1]} : vector<8x192xf32> to vector<8x64xf32>
    %147 = vector.extract_strided_slice %145 {offsets = [0, 0], sizes = [8, 64], strides = [1, 1]} : vector<8x192xf32> to vector<8x64xf32>
    %148 = arith.addf %146, %147 : vector<8x64xf32>
    %cst_50 = arith.constant 5.000000e-01 : f32
    %149 = vector.broadcast %cst_50 : f32 to vector<8x64xf32>
    %150 = arith.mulf %149, %148 : vector<8x64xf32>
    %151 = math.tanh %150 : vector<8x64xf32>
    %cst_51 = arith.constant 1.000000e+00 : f32
    %152 = vector.broadcast %cst_51 : f32 to vector<8x64xf32>
    %153 = arith.addf %151, %152 : vector<8x64xf32>
    %cst_52 = arith.constant 5.000000e-01 : f32
    %154 = vector.broadcast %cst_52 : f32 to vector<8x64xf32>
    %155 = arith.mulf %154, %153 : vector<8x64xf32>
    %156 = vector.extract_strided_slice %141 {offsets = [0, 64], sizes = [8, 64], strides = [1, 1]} : vector<8x192xf32> to vector<8x64xf32>
    %157 = vector.extract_strided_slice %145 {offsets = [0, 64], sizes = [8, 64], strides = [1, 1]} : vector<8x192xf32> to vector<8x64xf32>
    %158 = arith.addf %156, %157 : vector<8x64xf32>
    %cst_53 = arith.constant 5.000000e-01 : f32
    %159 = vector.broadcast %cst_53 : f32 to vector<8x64xf32>
    %160 = arith.mulf %159, %158 : vector<8x64xf32>
    %161 = math.tanh %160 : vector<8x64xf32>
    %cst_54 = arith.constant 1.000000e+00 : f32
    %162 = vector.broadcast %cst_54 : f32 to vector<8x64xf32>
    %163 = arith.addf %161, %162 : vector<8x64xf32>
    %cst_55 = arith.constant 5.000000e-01 : f32
    %164 = vector.broadcast %cst_55 : f32 to vector<8x64xf32>
    %165 = arith.mulf %164, %163 : vector<8x64xf32>
    %166 = vector.extract_strided_slice %141 {offsets = [0, 128], sizes = [8, 64], strides = [1, 1]} : vector<8x192xf32> to vector<8x64xf32>
    %167 = vector.extract_strided_slice %145 {offsets = [0, 128], sizes = [8, 64], strides = [1, 1]} : vector<8x192xf32> to vector<8x64xf32>
    %168 = arith.mulf %155, %167 : vector<8x64xf32>
    %169 = arith.addf %166, %168 : vector<8x64xf32>
    %170 = math.tanh %169 : vector<8x64xf32>
    %cst_56 = arith.constant 1.000000e+00 : f32
    %171 = vector.broadcast %cst_56 : f32 to vector<8x64xf32>
    %172 = arith.subf %171, %165 : vector<8x64xf32>
    %173 = arith.mulf %172, %170 : vector<8x64xf32>
    %174 = arith.mulf %165, %140 : vector<8x64xf32>
    %175 = arith.addf %173, %174 : vector<8x64xf32>
    %176 = tpu.concatenate %70, %105, %140, %175 in 0 : vector<8x64xf32>, vector<8x64xf32>, vector<8x64xf32>, vector<8x64xf32> -> vector<32x64xf32>
    %177 = tpu.concatenate %175, %140, %105, %70 in 0 : vector<8x64xf32>, vector<8x64xf32>, vector<8x64xf32>, vector<8x64xf32> -> vector<32x64xf32>
    %c0_57 = arith.constant 0 : index
    %c0_58 = arith.constant 0 : index
    %178 = vector.load %arg11[%c0_57, %c0_58] : memref<64x192xbf16, #tpu.memory_space<vmem>>, vector<64x192xbf16>
    %179 = arith.truncf %176 : vector<32x64xf32> to vector<32x64xbf16>
    %cst_59 = arith.constant dense<0.000000e+00> : vector<32x192xf32>
    %180 = tpu.matmul %179, %178, %cst_59 {dimension_numbers = #tpu.dot_dimension_numbers<[1], [0], [0], [1], [0, 0, 1, 1], [], []>} : vector<32x64xbf16>, vector<64x192xbf16>, vector<32x192xf32> -> vector<32x192xf32>
    %c0_60 = arith.constant 0 : index
    %c0_61 = arith.constant 0 : index
    %181 = vector.load %arg12[%c0_60, %c0_61] : memref<64x192xbf16, #tpu.memory_space<vmem>>, vector<64x192xbf16>
    %182 = arith.truncf %177 : vector<32x64xf32> to vector<32x64xbf16>
    %cst_62 = arith.constant dense<0.000000e+00> : vector<32x192xf32>
    %183 = tpu.matmul %182, %181, %cst_62 {dimension_numbers = #tpu.dot_dimension_numbers<[1], [0], [0], [1], [0, 0, 1, 1], [], []>} : vector<32x64xbf16>, vector<64x192xbf16>, vector<32x192xf32> -> vector<32x192xf32>
    %184 = arith.addf %180, %183 : vector<32x192xf32>
    %c0_63 = arith.constant 0 : index
    %c0_64 = arith.constant 0 : index
    %185 = vector.load %arg13[%c0_63, %c0_64] : memref<1x192xf32, #tpu.memory_space<vmem>>, vector<1x192xf32>
    %186 = vector.broadcast %185 : vector<1x192xf32> to vector<32x192xf32>
    %187 = arith.addf %184, %186 : vector<32x192xf32>
    %c0_65 = arith.constant 0 : index
    %c0_66 = arith.constant 0 : index
    %188 = vector.load %arg14[%c0_65, %c0_66] : memref<64x192xbf16, #tpu.memory_space<vmem>>, vector<64x192xbf16>
    %c0_67 = arith.constant 0 : index
    %c0_68 = arith.constant 0 : index
    %189 = vector.load %arg15[%c0_67, %c0_68] : memref<1x192xf32, #tpu.memory_space<vmem>>, vector<1x192xf32>
    %cst_69 = arith.constant 0.000000e+00 : f32
    %190 = vector.broadcast %cst_69 : f32 to vector<8x64xf32>
    %191 = vector.extract_strided_slice %187 {offsets = [0, 0], sizes = [8, 192], strides = [1, 1]} : vector<32x192xf32> to vector<8x192xf32>
    %192 = arith.truncf %190 : vector<8x64xf32> to vector<8x64xbf16>
    %cst_70 = arith.constant dense<0.000000e+00> : vector<8x192xf32>
    %193 = tpu.matmul %192, %188, %cst_70 {dimension_numbers = #tpu.dot_dimension_numbers<[1], [0], [0], [1], [0, 0, 1, 1], [], []>} : vector<8x64xbf16>, vector<64x192xbf16>, vector<8x192xf32> -> vector<8x192xf32>
    %194 = vector.broadcast %189 : vector<1x192xf32> to vector<8x192xf32>
    %195 = arith.addf %193, %194 : vector<8x192xf32>
    %196 = vector.extract_strided_slice %191 {offsets = [0, 0], sizes = [8, 64], strides = [1, 1]} : vector<8x192xf32> to vector<8x64xf32>
    %197 = vector.extract_strided_slice %195 {offsets = [0, 0], sizes = [8, 64], strides = [1, 1]} : vector<8x192xf32> to vector<8x64xf32>
    %198 = arith.addf %196, %197 : vector<8x64xf32>
    %cst_71 = arith.constant 5.000000e-01 : f32
    %199 = vector.broadcast %cst_71 : f32 to vector<8x64xf32>
    %200 = arith.mulf %199, %198 : vector<8x64xf32>
    %201 = math.tanh %200 : vector<8x64xf32>
    %cst_72 = arith.constant 1.000000e+00 : f32
    %202 = vector.broadcast %cst_72 : f32 to vector<8x64xf32>
    %203 = arith.addf %201, %202 : vector<8x64xf32>
    %cst_73 = arith.constant 5.000000e-01 : f32
    %204 = vector.broadcast %cst_73 : f32 to vector<8x64xf32>
    %205 = arith.mulf %204, %203 : vector<8x64xf32>
    %206 = vector.extract_strided_slice %191 {offsets = [0, 64], sizes = [8, 64], strides = [1, 1]} : vector<8x192xf32> to vector<8x64xf32>
    %207 = vector.extract_strided_slice %195 {offsets = [0, 64], sizes = [8, 64], strides = [1, 1]} : vector<8x192xf32> to vector<8x64xf32>
    %208 = arith.addf %206, %207 : vector<8x64xf32>
    %cst_74 = arith.constant 5.000000e-01 : f32
    %209 = vector.broadcast %cst_74 : f32 to vector<8x64xf32>
    %210 = arith.mulf %209, %208 : vector<8x64xf32>
    %211 = math.tanh %210 : vector<8x64xf32>
    %cst_75 = arith.constant 1.000000e+00 : f32
    %212 = vector.broadcast %cst_75 : f32 to vector<8x64xf32>
    %213 = arith.addf %211, %212 : vector<8x64xf32>
    %cst_76 = arith.constant 5.000000e-01 : f32
    %214 = vector.broadcast %cst_76 : f32 to vector<8x64xf32>
    %215 = arith.mulf %214, %213 : vector<8x64xf32>
    %216 = vector.extract_strided_slice %191 {offsets = [0, 128], sizes = [8, 64], strides = [1, 1]} : vector<8x192xf32> to vector<8x64xf32>
    %217 = vector.extract_strided_slice %195 {offsets = [0, 128], sizes = [8, 64], strides = [1, 1]} : vector<8x192xf32> to vector<8x64xf32>
    %218 = arith.mulf %205, %217 : vector<8x64xf32>
    %219 = arith.addf %216, %218 : vector<8x64xf32>
    %220 = math.tanh %219 : vector<8x64xf32>
    %cst_77 = arith.constant 1.000000e+00 : f32
    %221 = vector.broadcast %cst_77 : f32 to vector<8x64xf32>
    %222 = arith.subf %221, %215 : vector<8x64xf32>
    %223 = arith.mulf %222, %220 : vector<8x64xf32>
    %224 = arith.mulf %215, %190 : vector<8x64xf32>
    %225 = arith.addf %223, %224 : vector<8x64xf32>
    %226 = vector.extract_strided_slice %187 {offsets = [8, 0], sizes = [8, 192], strides = [1, 1]} : vector<32x192xf32> to vector<8x192xf32>
    %227 = arith.truncf %225 : vector<8x64xf32> to vector<8x64xbf16>
    %cst_78 = arith.constant dense<0.000000e+00> : vector<8x192xf32>
    %228 = tpu.matmul %227, %188, %cst_78 {dimension_numbers = #tpu.dot_dimension_numbers<[1], [0], [0], [1], [0, 0, 1, 1], [], []>} : vector<8x64xbf16>, vector<64x192xbf16>, vector<8x192xf32> -> vector<8x192xf32>
    %229 = vector.broadcast %189 : vector<1x192xf32> to vector<8x192xf32>
    %230 = arith.addf %228, %229 : vector<8x192xf32>
    %231 = vector.extract_strided_slice %226 {offsets = [0, 0], sizes = [8, 64], strides = [1, 1]} : vector<8x192xf32> to vector<8x64xf32>
    %232 = vector.extract_strided_slice %230 {offsets = [0, 0], sizes = [8, 64], strides = [1, 1]} : vector<8x192xf32> to vector<8x64xf32>
    %233 = arith.addf %231, %232 : vector<8x64xf32>
    %cst_79 = arith.constant 5.000000e-01 : f32
    %234 = vector.broadcast %cst_79 : f32 to vector<8x64xf32>
    %235 = arith.mulf %234, %233 : vector<8x64xf32>
    %236 = math.tanh %235 : vector<8x64xf32>
    %cst_80 = arith.constant 1.000000e+00 : f32
    %237 = vector.broadcast %cst_80 : f32 to vector<8x64xf32>
    %238 = arith.addf %236, %237 : vector<8x64xf32>
    %cst_81 = arith.constant 5.000000e-01 : f32
    %239 = vector.broadcast %cst_81 : f32 to vector<8x64xf32>
    %240 = arith.mulf %239, %238 : vector<8x64xf32>
    %241 = vector.extract_strided_slice %226 {offsets = [0, 64], sizes = [8, 64], strides = [1, 1]} : vector<8x192xf32> to vector<8x64xf32>
    %242 = vector.extract_strided_slice %230 {offsets = [0, 64], sizes = [8, 64], strides = [1, 1]} : vector<8x192xf32> to vector<8x64xf32>
    %243 = arith.addf %241, %242 : vector<8x64xf32>
    %cst_82 = arith.constant 5.000000e-01 : f32
    %244 = vector.broadcast %cst_82 : f32 to vector<8x64xf32>
    %245 = arith.mulf %244, %243 : vector<8x64xf32>
    %246 = math.tanh %245 : vector<8x64xf32>
    %cst_83 = arith.constant 1.000000e+00 : f32
    %247 = vector.broadcast %cst_83 : f32 to vector<8x64xf32>
    %248 = arith.addf %246, %247 : vector<8x64xf32>
    %cst_84 = arith.constant 5.000000e-01 : f32
    %249 = vector.broadcast %cst_84 : f32 to vector<8x64xf32>
    %250 = arith.mulf %249, %248 : vector<8x64xf32>
    %251 = vector.extract_strided_slice %226 {offsets = [0, 128], sizes = [8, 64], strides = [1, 1]} : vector<8x192xf32> to vector<8x64xf32>
    %252 = vector.extract_strided_slice %230 {offsets = [0, 128], sizes = [8, 64], strides = [1, 1]} : vector<8x192xf32> to vector<8x64xf32>
    %253 = arith.mulf %240, %252 : vector<8x64xf32>
    %254 = arith.addf %251, %253 : vector<8x64xf32>
    %255 = math.tanh %254 : vector<8x64xf32>
    %cst_85 = arith.constant 1.000000e+00 : f32
    %256 = vector.broadcast %cst_85 : f32 to vector<8x64xf32>
    %257 = arith.subf %256, %250 : vector<8x64xf32>
    %258 = arith.mulf %257, %255 : vector<8x64xf32>
    %259 = arith.mulf %250, %225 : vector<8x64xf32>
    %260 = arith.addf %258, %259 : vector<8x64xf32>
    %261 = vector.extract_strided_slice %187 {offsets = [16, 0], sizes = [8, 192], strides = [1, 1]} : vector<32x192xf32> to vector<8x192xf32>
    %262 = arith.truncf %260 : vector<8x64xf32> to vector<8x64xbf16>
    %cst_86 = arith.constant dense<0.000000e+00> : vector<8x192xf32>
    %263 = tpu.matmul %262, %188, %cst_86 {dimension_numbers = #tpu.dot_dimension_numbers<[1], [0], [0], [1], [0, 0, 1, 1], [], []>} : vector<8x64xbf16>, vector<64x192xbf16>, vector<8x192xf32> -> vector<8x192xf32>
    %264 = vector.broadcast %189 : vector<1x192xf32> to vector<8x192xf32>
    %265 = arith.addf %263, %264 : vector<8x192xf32>
    %266 = vector.extract_strided_slice %261 {offsets = [0, 0], sizes = [8, 64], strides = [1, 1]} : vector<8x192xf32> to vector<8x64xf32>
    %267 = vector.extract_strided_slice %265 {offsets = [0, 0], sizes = [8, 64], strides = [1, 1]} : vector<8x192xf32> to vector<8x64xf32>
    %268 = arith.addf %266, %267 : vector<8x64xf32>
    %cst_87 = arith.constant 5.000000e-01 : f32
    %269 = vector.broadcast %cst_87 : f32 to vector<8x64xf32>
    %270 = arith.mulf %269, %268 : vector<8x64xf32>
    %271 = math.tanh %270 : vector<8x64xf32>
    %cst_88 = arith.constant 1.000000e+00 : f32
    %272 = vector.broadcast %cst_88 : f32 to vector<8x64xf32>
    %273 = arith.addf %271, %272 : vector<8x64xf32>
    %cst_89 = arith.constant 5.000000e-01 : f32
    %274 = vector.broadcast %cst_89 : f32 to vector<8x64xf32>
    %275 = arith.mulf %274, %273 : vector<8x64xf32>
    %276 = vector.extract_strided_slice %261 {offsets = [0, 64], sizes = [8, 64], strides = [1, 1]} : vector<8x192xf32> to vector<8x64xf32>
    %277 = vector.extract_strided_slice %265 {offsets = [0, 64], sizes = [8, 64], strides = [1, 1]} : vector<8x192xf32> to vector<8x64xf32>
    %278 = arith.addf %276, %277 : vector<8x64xf32>
    %cst_90 = arith.constant 5.000000e-01 : f32
    %279 = vector.broadcast %cst_90 : f32 to vector<8x64xf32>
    %280 = arith.mulf %279, %278 : vector<8x64xf32>
    %281 = math.tanh %280 : vector<8x64xf32>
    %cst_91 = arith.constant 1.000000e+00 : f32
    %282 = vector.broadcast %cst_91 : f32 to vector<8x64xf32>
    %283 = arith.addf %281, %282 : vector<8x64xf32>
    %cst_92 = arith.constant 5.000000e-01 : f32
    %284 = vector.broadcast %cst_92 : f32 to vector<8x64xf32>
    %285 = arith.mulf %284, %283 : vector<8x64xf32>
    %286 = vector.extract_strided_slice %261 {offsets = [0, 128], sizes = [8, 64], strides = [1, 1]} : vector<8x192xf32> to vector<8x64xf32>
    %287 = vector.extract_strided_slice %265 {offsets = [0, 128], sizes = [8, 64], strides = [1, 1]} : vector<8x192xf32> to vector<8x64xf32>
    %288 = arith.mulf %275, %287 : vector<8x64xf32>
    %289 = arith.addf %286, %288 : vector<8x64xf32>
    %290 = math.tanh %289 : vector<8x64xf32>
    %cst_93 = arith.constant 1.000000e+00 : f32
    %291 = vector.broadcast %cst_93 : f32 to vector<8x64xf32>
    %292 = arith.subf %291, %285 : vector<8x64xf32>
    %293 = arith.mulf %292, %290 : vector<8x64xf32>
    %294 = arith.mulf %285, %260 : vector<8x64xf32>
    %295 = arith.addf %293, %294 : vector<8x64xf32>
    %296 = vector.extract_strided_slice %187 {offsets = [24, 0], sizes = [8, 192], strides = [1, 1]} : vector<32x192xf32> to vector<8x192xf32>
    %297 = arith.truncf %295 : vector<8x64xf32> to vector<8x64xbf16>
    %cst_94 = arith.constant dense<0.000000e+00> : vector<8x192xf32>
    %298 = tpu.matmul %297, %188, %cst_94 {dimension_numbers = #tpu.dot_dimension_numbers<[1], [0], [0], [1], [0, 0, 1, 1], [], []>} : vector<8x64xbf16>, vector<64x192xbf16>, vector<8x192xf32> -> vector<8x192xf32>
    %299 = vector.broadcast %189 : vector<1x192xf32> to vector<8x192xf32>
    %300 = arith.addf %298, %299 : vector<8x192xf32>
    %301 = vector.extract_strided_slice %296 {offsets = [0, 0], sizes = [8, 64], strides = [1, 1]} : vector<8x192xf32> to vector<8x64xf32>
    %302 = vector.extract_strided_slice %300 {offsets = [0, 0], sizes = [8, 64], strides = [1, 1]} : vector<8x192xf32> to vector<8x64xf32>
    %303 = arith.addf %301, %302 : vector<8x64xf32>
    %cst_95 = arith.constant 5.000000e-01 : f32
    %304 = vector.broadcast %cst_95 : f32 to vector<8x64xf32>
    %305 = arith.mulf %304, %303 : vector<8x64xf32>
    %306 = math.tanh %305 : vector<8x64xf32>
    %cst_96 = arith.constant 1.000000e+00 : f32
    %307 = vector.broadcast %cst_96 : f32 to vector<8x64xf32>
    %308 = arith.addf %306, %307 : vector<8x64xf32>
    %cst_97 = arith.constant 5.000000e-01 : f32
    %309 = vector.broadcast %cst_97 : f32 to vector<8x64xf32>
    %310 = arith.mulf %309, %308 : vector<8x64xf32>
    %311 = vector.extract_strided_slice %296 {offsets = [0, 64], sizes = [8, 64], strides = [1, 1]} : vector<8x192xf32> to vector<8x64xf32>
    %312 = vector.extract_strided_slice %300 {offsets = [0, 64], sizes = [8, 64], strides = [1, 1]} : vector<8x192xf32> to vector<8x64xf32>
    %313 = arith.addf %311, %312 : vector<8x64xf32>
    %cst_98 = arith.constant 5.000000e-01 : f32
    %314 = vector.broadcast %cst_98 : f32 to vector<8x64xf32>
    %315 = arith.mulf %314, %313 : vector<8x64xf32>
    %316 = math.tanh %315 : vector<8x64xf32>
    %cst_99 = arith.constant 1.000000e+00 : f32
    %317 = vector.broadcast %cst_99 : f32 to vector<8x64xf32>
    %318 = arith.addf %316, %317 : vector<8x64xf32>
    %cst_100 = arith.constant 5.000000e-01 : f32
    %319 = vector.broadcast %cst_100 : f32 to vector<8x64xf32>
    %320 = arith.mulf %319, %318 : vector<8x64xf32>
    %321 = vector.extract_strided_slice %296 {offsets = [0, 128], sizes = [8, 64], strides = [1, 1]} : vector<8x192xf32> to vector<8x64xf32>
    %322 = vector.extract_strided_slice %300 {offsets = [0, 128], sizes = [8, 64], strides = [1, 1]} : vector<8x192xf32> to vector<8x64xf32>
    %323 = arith.mulf %310, %322 : vector<8x64xf32>
    %324 = arith.addf %321, %323 : vector<8x64xf32>
    %325 = math.tanh %324 : vector<8x64xf32>
    %cst_101 = arith.constant 1.000000e+00 : f32
    %326 = vector.broadcast %cst_101 : f32 to vector<8x64xf32>
    %327 = arith.subf %326, %320 : vector<8x64xf32>
    %328 = arith.mulf %327, %325 : vector<8x64xf32>
    %329 = arith.mulf %320, %295 : vector<8x64xf32>
    %330 = arith.addf %328, %329 : vector<8x64xf32>
    %331 = tpu.concatenate %225, %260, %295, %330 in 0 : vector<8x64xf32>, vector<8x64xf32>, vector<8x64xf32>, vector<8x64xf32> -> vector<32x64xf32>
    %332 = tpu.concatenate %330, %295, %260, %225 in 0 : vector<8x64xf32>, vector<8x64xf32>, vector<8x64xf32>, vector<8x64xf32> -> vector<32x64xf32>
    %c0_102 = arith.constant 0 : index
    %c0_103 = arith.constant 0 : index
    %333 = vector.load %arg16[%c0_102, %c0_103] : memref<64x4xf32, #tpu.memory_space<vmem>>, vector<64x4xf32>
    %cst_104 = arith.constant dense<0.000000e+00> : vector<32x4xf32>
    %334 = tpu.matmul %331, %333, %cst_104 {dimension_numbers = #tpu.dot_dimension_numbers<[1], [0], [0], [1], [0, 0, 1, 1], [], []>} : vector<32x64xf32>, vector<64x4xf32>, vector<32x4xf32> -> vector<32x4xf32>
    %c0_105 = arith.constant 0 : index
    %c0_106 = arith.constant 0 : index
    %335 = vector.load %arg17[%c0_105, %c0_106] : memref<64x4xf32, #tpu.memory_space<vmem>>, vector<64x4xf32>
    %cst_107 = arith.constant dense<0.000000e+00> : vector<32x4xf32>
    %336 = tpu.matmul %332, %335, %cst_107 {dimension_numbers = #tpu.dot_dimension_numbers<[1], [0], [0], [1], [0, 0, 1, 1], [], []>} : vector<32x64xf32>, vector<64x4xf32>, vector<32x4xf32> -> vector<32x4xf32>
    %337 = arith.addf %334, %336 : vector<32x4xf32>
    %338 = tpu.iota {dimensions = array<i32: 1>} : vector<1x4xi32>
    %cst_108 = arith.constant 0.000000e+00 : f32
    %339 = vector.broadcast %cst_108 : f32 to vector<8x4xf32>
    %340 = vector.extract_strided_slice %337 {offsets = [0, 0], sizes = [8, 4], strides = [1, 1]} : vector<32x4xf32> to vector<8x4xf32>
    %c0_i32 = arith.constant 0 : i32
    %341 = vector.broadcast %c0_i32 : i32 to vector<1x4xi32>
    %342 = arith.cmpi eq, %338, %341 : vector<1x4xi32>
    %343 = arith.extui %342 : vector<1x4xi1> to vector<1x4xi32>
    %344 = arith.sitofp %343 : vector<1x4xi32> to vector<1x4xf32>
    %345 = vector.broadcast %344 : vector<1x4xf32> to vector<8x4xf32>
    %346 = arith.mulf %340, %345 : vector<8x4xf32>
    %347 = arith.addf %339, %346 : vector<8x4xf32>
    %348 = vector.extract_strided_slice %337 {offsets = [8, 0], sizes = [8, 4], strides = [1, 1]} : vector<32x4xf32> to vector<8x4xf32>
    %c1_i32 = arith.constant 1 : i32
    %349 = vector.broadcast %c1_i32 : i32 to vector<1x4xi32>
    %350 = arith.cmpi eq, %338, %349 : vector<1x4xi32>
    %351 = arith.extui %350 : vector<1x4xi1> to vector<1x4xi32>
    %352 = arith.sitofp %351 : vector<1x4xi32> to vector<1x4xf32>
    %353 = vector.broadcast %352 : vector<1x4xf32> to vector<8x4xf32>
    %354 = arith.mulf %348, %353 : vector<8x4xf32>
    %355 = arith.addf %347, %354 : vector<8x4xf32>
    %356 = vector.extract_strided_slice %337 {offsets = [16, 0], sizes = [8, 4], strides = [1, 1]} : vector<32x4xf32> to vector<8x4xf32>
    %c2_i32 = arith.constant 2 : i32
    %357 = vector.broadcast %c2_i32 : i32 to vector<1x4xi32>
    %358 = arith.cmpi eq, %338, %357 : vector<1x4xi32>
    %359 = arith.extui %358 : vector<1x4xi1> to vector<1x4xi32>
    %360 = arith.sitofp %359 : vector<1x4xi32> to vector<1x4xf32>
    %361 = vector.broadcast %360 : vector<1x4xf32> to vector<8x4xf32>
    %362 = arith.mulf %356, %361 : vector<8x4xf32>
    %363 = arith.addf %355, %362 : vector<8x4xf32>
    %364 = vector.extract_strided_slice %337 {offsets = [24, 0], sizes = [8, 4], strides = [1, 1]} : vector<32x4xf32> to vector<8x4xf32>
    %c3_i32 = arith.constant 3 : i32
    %365 = vector.broadcast %c3_i32 : i32 to vector<1x4xi32>
    %366 = arith.cmpi eq, %338, %365 : vector<1x4xi32>
    %367 = arith.extui %366 : vector<1x4xi1> to vector<1x4xi32>
    %368 = arith.sitofp %367 : vector<1x4xi32> to vector<1x4xf32>
    %369 = vector.broadcast %368 : vector<1x4xf32> to vector<8x4xf32>
    %370 = arith.mulf %364, %369 : vector<8x4xf32>
    %371 = arith.addf %363, %370 : vector<8x4xf32>
    %c0_109 = arith.constant 0 : index
    %c0_110 = arith.constant 0 : index
    %372 = vector.load %arg18[%c0_109, %c0_110] : memref<1x4xf32, #tpu.memory_space<vmem>>, vector<1x4xf32>
    %373 = vector.broadcast %372 : vector<1x4xf32> to vector<8x4xf32>
    %374 = arith.addf %371, %373 : vector<8x4xf32>
    %375 = math.tanh %374 : vector<8x4xf32>
    %cst_111 = arith.constant 2.000000e+00 : f32
    %376 = vector.broadcast %cst_111 : f32 to vector<8x4xf32>
    %377 = arith.mulf %376, %375 : vector<8x4xf32>
    %c0_112 = arith.constant 0 : index
    %c0_113 = arith.constant 0 : index
    %378 = vector.load %arg19[%c0_112, %c0_113] : memref<8x4xf32, #tpu.memory_space<vmem>>, vector<8x4xf32>
    tpu.vector_store %arg19[%c0_112, %c0_113], %377 {strides = array<i32>} : memref<8x4xf32, #tpu.memory_space<vmem>>, vector<8x4xf32>,
    return
  }
  func.func @transform_0(%arg0: i32) -> (i32, i32) {
    %c0_i32 = arith.constant 0 : i32
    %c0_i32_0 = arith.constant 0 : i32
    return %arg0, %c0_i32 : i32, i32
  }
  func.func @transform_1(%arg0: i32) -> (i32, i32) {
    %c0_i32 = arith.constant 0 : i32
    %c0_i32_0 = arith.constant 0 : i32
    %c0_i32_1 = arith.constant 0 : i32
    return %c0_i32, %c0_i32_0 : i32, i32
  }
  func.func @transform_2(%arg0: i32) -> (i32, i32) {
    %c0_i32 = arith.constant 0 : i32
    %c0_i32_0 = arith.constant 0 : i32
    %c0_i32_1 = arith.constant 0 : i32
    return %c0_i32, %c0_i32_0 : i32, i32
  }
  func.func @transform_3(%arg0: i32) -> (i32, i32) {
    %c0_i32 = arith.constant 0 : i32
    %c0_i32_0 = arith.constant 0 : i32
    %c0_i32_1 = arith.constant 0 : i32
    return %c0_i32, %c0_i32_0 : i32, i32
  }
  func.func @transform_4(%arg0: i32) -> (i32, i32) {
    %c0_i32 = arith.constant 0 : i32
    %c0_i32_0 = arith.constant 0 : i32
    %c0_i32_1 = arith.constant 0 : i32
    return %c0_i32, %c0_i32_0 : i32, i32
  }
  func.func @transform_5(%arg0: i32) -> (i32, i32) {
    %c0_i32 = arith.constant 0 : i32
    %c0_i32_0 = arith.constant 0 : i32
    %c0_i32_1 = arith.constant 0 : i32
    return %c0_i32, %c0_i32_0 : i32, i32
  }
  func.func @transform_6(%arg0: i32) -> (i32, i32) {
    %c0_i32 = arith.constant 0 : i32
    %c0_i32_0 = arith.constant 0 : i32
    %c0_i32_1 = arith.constant 0 : i32
    return %c0_i32, %c0_i32_0 : i32, i32
  }
  func.func @transform_7(%arg0: i32) -> (i32, i32) {
    %c0_i32 = arith.constant 0 : i32
    %c0_i32_0 = arith.constant 0 : i32
    %c0_i32_1 = arith.constant 0 : i32
    return %c0_i32, %c0_i32_0 : i32, i32
  }
  func.func @transform_8(%arg0: i32) -> (i32, i32) {
    %c0_i32 = arith.constant 0 : i32
    %c0_i32_0 = arith.constant 0 : i32
    %c0_i32_1 = arith.constant 0 : i32
    return %c0_i32, %c0_i32_0 : i32, i32
  }
  func.func @transform_9(%arg0: i32) -> (i32, i32) {
    %c0_i32 = arith.constant 0 : i32
    %c0_i32_0 = arith.constant 0 : i32
    %c0_i32_1 = arith.constant 0 : i32
    return %c0_i32, %c0_i32_0 : i32, i32
  }
  func.func @transform_10(%arg0: i32) -> (i32, i32) {
    %c0_i32 = arith.constant 0 : i32
    %c0_i32_0 = arith.constant 0 : i32
    %c0_i32_1 = arith.constant 0 : i32
    return %c0_i32, %c0_i32_0 : i32, i32
  }
  func.func @transform_11(%arg0: i32) -> (i32, i32) {
    %c0_i32 = arith.constant 0 : i32
    %c0_i32_0 = arith.constant 0 : i32
    %c0_i32_1 = arith.constant 0 : i32
    return %c0_i32, %c0_i32_0 : i32, i32
  }
  func.func @transform_12(%arg0: i32) -> (i32, i32) {
    %c0_i32 = arith.constant 0 : i32
    %c0_i32_0 = arith.constant 0 : i32
    %c0_i32_1 = arith.constant 0 : i32
    return %c0_i32, %c0_i32_0 : i32, i32
  }
  func.func @transform_13(%arg0: i32) -> (i32, i32) {
    %c0_i32 = arith.constant 0 : i32
    %c0_i32_0 = arith.constant 0 : i32
    %c0_i32_1 = arith.constant 0 : i32
    return %c0_i32, %c0_i32_0 : i32, i32
  }
  func.func @transform_14(%arg0: i32) -> (i32, i32) {
    %c0_i32 = arith.constant 0 : i32
    %c0_i32_0 = arith.constant 0 : i32
    %c0_i32_1 = arith.constant 0 : i32
    return %c0_i32, %c0_i32_0 : i32, i32
  }
  func.func @transform_15(%arg0: i32) -> (i32, i32) {
    %c0_i32 = arith.constant 0 : i32
    %c0_i32_0 = arith.constant 0 : i32
    %c0_i32_1 = arith.constant 0 : i32
    return %c0_i32, %c0_i32_0 : i32, i32
  }
  func.func @transform_16(%arg0: i32) -> (i32, i32) {
    %c0_i32 = arith.constant 0 : i32
    %c0_i32_0 = arith.constant 0 : i32
    %c0_i32_1 = arith.constant 0 : i32
    return %c0_i32, %c0_i32_0 : i32, i32
  }
  func.func @transform_17(%arg0: i32) -> (i32, i32) {
    %c0_i32 = arith.constant 0 : i32
    %c0_i32_0 = arith.constant 0 : i32
    %c0_i32_1 = arith.constant 0 : i32
    return %c0_i32, %c0_i32_0 : i32, i32
  }
  func.func @transform_18(%arg0: i32) -> (i32, i32) {
    %c0_i32 = arith.constant 0 : i32
    %c0_i32_0 = arith.constant 0 : i32
    return %arg0, %c0_i32 : i32, i32
  }
}

</mosaic_0001>

<llo_original>
// kernel: tpu_custom_call.1
$region0: #{tpu_custom_call.1}
  #allocation0 [shape = 'u32[]', space=smem, size = 0x4, offset = 0x4, fixed_abs, tag = 'smem constant byte address 0x4 - core index']
  #allocation1 [shape = 'u32[144,128]{1,0:T(1,128)}', space=vmem, size = 0x12000, scoped, tag = 'internal scratch']
  %s0 = inlined_call_operand.vmem [shape: f32[8,16], index: 0, kind: input, shape index: {}]
  %s1 = inlined_call_operand.hbm [shape: bf16[16,128], index: 1, kind: input, shape index: {}]
  %s2 = inlined_call_operand.vmem [shape: f32[1,128], index: 2, kind: input, shape index: {}]
  %s3 = inlined_call_operand.vmem [shape: bf16[128,128], index: 3, kind: input, shape index: {}]
  %s4 = inlined_call_operand.hbm [shape: f32[1,128], index: 4, kind: input, shape index: {}]
  %s5 = inlined_call_operand.hbm [shape: bf16[32,192], index: 5, kind: input, shape index: {}]
  %s6 = inlined_call_operand.hbm [shape: bf16[32,192], index: 6, kind: input, shape index: {}]
  %s7 = inlined_call_operand.vmem [shape: f32[1,192], index: 7, kind: input, shape index: {}]
  %s8 = inlined_call_operand.vmem [shape: bf16[64,192], index: 8, kind: input, shape index: {}]
  %s9 = inlined_call_operand.vmem [shape: f32[1,192], index: 9, kind: input, shape index: {}]
  %s10 = inlined_call_operand.hbm [shape: bf16[64,192], index: 10, kind: input, shape index: {}]
  %s11 = inlined_call_operand.hbm [shape: bf16[64,192], index: 11, kind: input, shape index: {}]
  %s12 = inlined_call_operand.vmem [shape: f32[1,192], index: 12, kind: input, shape index: {}]
  %s13 = inlined_call_operand.hbm [shape: bf16[64,192], index: 13, kind: input, shape index: {}]
  %s14 = inlined_call_operand.vmem [shape: f32[1,192], index: 14, kind: input, shape index: {}]
  %s15 = inlined_call_operand.vmem [shape: f32[64,4], index: 15, kind: input, shape index: {}]
  %s16 = inlined_call_operand.vmem [shape: f32[64,4], index: 16, kind: input, shape index: {}]
  %s17 = inlined_call_operand.vmem [shape: f32[1,4], index: 17, kind: input, shape index: {}]
  %s18 = inlined_call_operand.vmem [shape: f32[8,4], index: 18, kind: output, shape index: {}]
  %s19 = sld [smem:[#allocation0]]
  $region110: #{tpu_custom_call.1} parent=0
    _
  %s21 = ssub.s32 1, %s19
  %s22 = scalar_select 0, %s21, %s19
  $region1: #{tpu_custom_call.1} parent=0
    #allocation2 [shape = 'u8[4096]{0}', space=vmem, size = 0x1000, scoped, tag = 'input window, operand 1, single buffered']
    #allocation3 [shape = 's32[1]{0}', space=sflag, size = 0x4, scoped, tag = 'scoped memory for tpu_custom_call.1']
    #allocation4 [shape = 'u8[512]{0}', space=vmem, size = 0x400, scoped, tag = 'input window, operand 4, single buffered']
    #allocation5 [shape = 's32[1]{0}', space=sflag, size = 0x4, scoped, tag = 'scoped memory for tpu_custom_call.1']
    #allocation6 [shape = 'u8[16384]{0}', space=vmem, size = 0x4000, scoped, tag = 'input window, operand 5, single buffered']
    #allocation7 [shape = 'u8[16384]{0}', space=vmem, size = 0x4000, scoped, tag = 'input window, operand 6, single buffered']
    #allocation8 [shape = 's32[1]{0}', space=sflag, size = 0x4, scoped, tag = 'scoped memory for tpu_custom_call.1']
    #allocation9 [shape = 'u8[32768]{0}', space=vmem, size = 0x8000, scoped, tag = 'input window, operand 10, single buffered']
    #allocation10 [shape = 'u8[32768]{0}', space=vmem, size = 0x8000, scoped, tag = 'input window, operand 11, single buffered']
    #allocation11 [shape = 's32[1]{0}', space=sflag, size = 0x4, scoped, tag = 'scoped memory for tpu_custom_call.1']
    #allocation12 [shape = 'u8[32768]{0}', space=vmem, size = 0x8000, scoped, tag = 'input window, operand 13, single buffered']
    %23 = vsyncpa [#allocation3], 0
    %24 = vsyncpa [#allocation5], 0
    %25 = vsyncpa [#allocation8], 0
    %26 = vsyncpa [#allocation11], 0
    // Predicated region
    $region2: #{tpu_custom_call.1} parent=1 // pred_check
      _
    $region3: #{tpu_custom_call.1} parent=1 // pred_check_branch
      %28 = sbr.rel (0) target = $region5
    $region4: #{tpu_custom_call.1} parent=1 // pred_region
      _
    $region5: #{tpu_custom_call.1} parent=1 // pred_fallthru
      _
    // Predicated region
    $region6: #{tpu_custom_call.1} parent=1 // pred_check
      _
    $region7: #{tpu_custom_call.1} parent=1 // pred_check_branch
      %30 = sbr.rel (0) target = $region9
    $region8: #{tpu_custom_call.1} parent=1 // pred_region
      %s32 = ssub.s32 128, 128
      %33 = vsyncadd [#allocation3], %s32
      %s34 = sshll.u32 [#allocation2], 4
      %s35 = int_to_ptr.vmem [resolvable:$true] %s34
      %40 = dma.hbm_to_vmem [thread:$0]  %s1, 128, %s35, [#allocation3], 64, 64, 4
    $region9: #{tpu_custom_call.1} parent=1 // pred_fallthru
      _
    // Predicated region
    $region10: #{tpu_custom_call.1} parent=1 // pred_check
      _
    $region11: #{tpu_custom_call.1} parent=1 // pred_check_branch
      %42 = sbr.rel (0) target = $region13
    $region12: #{tpu_custom_call.1} parent=1 // pred_region
      _
    $region13: #{tpu_custom_call.1} parent=1 // pred_fallthru
      _
    // Predicated region
    $region14: #{tpu_custom_call.1} parent=1 // pred_check
      _
    $region15: #{tpu_custom_call.1} parent=1 // pred_check_branch
      %44 = sbr.rel (0) target = $region17
    $region16: #{tpu_custom_call.1} parent=1 // pred_region
      _
    $region17: #{tpu_custom_call.1} parent=1 // pred_fallthru
      _
    // Predicated region
    $region18: #{tpu_custom_call.1} parent=1 // pred_check
      _
    $region19: #{tpu_custom_call.1} parent=1 // pred_check_branch
      %46 = sbr.rel (0) target = $region21
    $region20: #{tpu_custom_call.1} parent=1 // pred_region
      %s48 = ssub.s32 16, 16
      %49 = vsyncadd [#allocation5], %s48
      %s51 = sshll.u32 [#allocation4], 4
      %s52 = int_to_ptr.vmem [resolvable:$true] %s51
      %54 = dma.hbm_to_vmem [thread:$0]  %s4, 16, %s52, [#allocation5]
    $region21: #{tpu_custom_call.1} parent=1 // pred_fallthru
      _
    // Predicated region
    $region22: #{tpu_custom_call.1} parent=1 // pred_check
      _
    $region23: #{tpu_custom_call.1} parent=1 // pred_check_branch
      %56 = sbr.rel (0) target = $region25
    $region24: #{tpu_custom_call.1} parent=1 // pred_region
      %s58 = ssub.s32 512, 512
      %59 = vsyncadd [#allocation5], %s58
      %s60 = sshll.u32 [#allocation6], 4
      %s61 = int_to_ptr.vmem [resolvable:$true] %s60
      %66 = dma.hbm_to_vmem [thread:$0]  %s5, 512, %s61, [#allocation5], 128, 128, 8
    $region25: #{tpu_custom_call.1} parent=1 // pred_fallthru
      _
    // Predicated region
    $region26: #{tpu_custom_call.1} parent=1 // pred_check
      _
    $region27: #{tpu_custom_call.1} parent=1 // pred_check_branch
      %68 = sbr.rel (0) target = $region29
    $region28: #{tpu_custom_call.1} parent=1 // pred_region
      %s70 = ssub.s32 512, 512
      %71 = vsyncadd [#allocation8], %s70
      %s72 = sshll.u32 [#allocation7], 4
      %s73 = int_to_ptr.vmem [resolvable:$true] %s72
      %78 = dma.hbm_to_vmem [thread:$0]  %s6, 512, %s73, [#allocation8], 128, 128, 8
    $region29: #{tpu_custom_call.1} parent=1 // pred_fallthru
      _
    // Predicated region
    $region30: #{tpu_custom_call.1} parent=1 // pred_check
      _
    $region31: #{tpu_custom_call.1} parent=1 // pred_check_branch
      %80 = sbr.rel (0) target = $region33
    $region32: #{tpu_custom_call.1} parent=1 // pred_region
      _
    $region33: #{tpu_custom_call.1} parent=1 // pred_fallthru
      _
    // Predicated region
    $region34: #{tpu_custom_call.1} parent=1 // pred_check
      _
    $region35: #{tpu_custom_call.1} parent=1 // pred_check_branch
      %82 = sbr.rel (0) target = $region37
    $region36: #{tpu_custom_call.1} parent=1 // pred_region
      _
    $region37: #{tpu_custom_call.1} parent=1 // pred_fallthru
      _
    // Predicated region
    $region38: #{tpu_custom_call.1} parent=1 // pred_check
      _
    $region39: #{tpu_custom_call.1} parent=1 // pred_check_branch
      %84 = sbr.rel (0) target = $region41
    $region40: #{tpu_custom_call.1} parent=1 // pred_region
      _
    $region41: #{tpu_custom_call.1} parent=1 // pred_fallthru
      _
    // Predicated region
    $region42: #{tpu_custom_call.1} parent=1 // pred_check
      _
    $region43: #{tpu_custom_call.1} parent=1 // pred_check_branch
      %86 = sbr.rel (0) target = $region45
    $region44: #{tpu_custom_call.1} parent=1 // pred_region
      %s88 = ssub.s32 1024, 1024
      %89 = vsyncadd [#allocation8], %s88
      %s90 = sshll.u32 [#allocation9], 4
      %s91 = int_to_ptr.vmem [resolvable:$true] %s90
      %96 = dma.hbm_to_vmem [thread:$0]  %s10, 1024, %s91, [#allocation8], 128, 128, 8
    $region45: #{tpu_custom_call.1} parent=1 // pred_fallthru
      _
    // Predicated region
    $region46: #{tpu_custom_call.1} parent=1 // pred_check
      _
    $region47: #{tpu_custom_call.1} parent=1 // pred_check_branch
      %98 = sbr.rel (0) target = $region49
    $region48: #{tpu_custom_call.1} parent=1 // pred_region
      %s100 = ssub.s32 1024, 1024
      %101 = vsyncadd [#allocation11], %s100
      %s102 = sshll.u32 [#allocation10], 4
      %s103 = int_to_ptr.vmem [resolvable:$true] %s102
      %108 = dma.hbm_to_vmem [thread:$0]  %s11, 1024, %s103, [#allocation11], 128, 128, 8
    $region49: #{tpu_custom_call.1} parent=1 // pred_fallthru
      _
    // Predicated region
    $region50: #{tpu_custom_call.1} parent=1 // pred_check
      _
    $region51: #{tpu_custom_call.1} parent=1 // pred_check_branch
      %110 = sbr.rel (0) target = $region53
    $region52: #{tpu_custom_call.1} parent=1 // pred_region
      _
    $region53: #{tpu_custom_call.1} parent=1 // pred_fallthru
      _
    // Predicated region
    $region54: #{tpu_custom_call.1} parent=1 // pred_check
      _
    $region55: #{tpu_custom_call.1} parent=1 // pred_check_branch
      %112 = sbr.rel (0) target = $region57
    $region56: #{tpu_custom_call.1} parent=1 // pred_region
      %s114 = ssub.s32 1024, 1024
      %115 = vsyncadd [#allocation11], %s114
      %s116 = sshll.u32 [#allocation12], 4
      %s117 = int_to_ptr.vmem [resolvable:$true] %s116
      %122 = dma.hbm_to_vmem [thread:$0]  %s13, 1024, %s117, [#allocation11], 128, 128, 8
    $region57: #{tpu_custom_call.1} parent=1 // pred_fallthru
      _
    // Predicated region
    $region58: #{tpu_custom_call.1} parent=1 // pred_check
      _
    $region59: #{tpu_custom_call.1} parent=1 // pred_check_branch
      %124 = sbr.rel (0) target = $region61
    $region60: #{tpu_custom_call.1} parent=1 // pred_region
      _
    $region61: #{tpu_custom_call.1} parent=1 // pred_fallthru
      _
    // Predicated region
    $region62: #{tpu_custom_call.1} parent=1 // pred_check
      _
    $region63: #{tpu_custom_call.1} parent=1 // pred_check_branch
      %126 = sbr.rel (0) target = $region65
    $region64: #{tpu_custom_call.1} parent=1 // pred_region
      _
    $region65: #{tpu_custom_call.1} parent=1 // pred_fallthru
      _
    // Predicated region
    $region66: #{tpu_custom_call.1} parent=1 // pred_check
      _
    $region67: #{tpu_custom_call.1} parent=1 // pred_check_branch
      %128 = sbr.rel (0) target = $region69
    $region68: #{tpu_custom_call.1} parent=1 // pred_region
      _
    $region69: #{tpu_custom_call.1} parent=1 // pred_fallthru
      _
    // Predicated region
    $region70: #{tpu_custom_call.1} parent=1 // pred_check
      _
    $region71: #{tpu_custom_call.1} parent=1 // pred_check_branch
      %130 = sbr.rel (0) target = $region73
    $region72: #{tpu_custom_call.1} parent=1 // pred_region
      _
    $region73: #{tpu_custom_call.1} parent=1 // pred_fallthru
      _
    // Predicated region
    $region74: #{tpu_custom_call.1} parent=1 // pred_check
      _
    $region75: #{tpu_custom_call.1} parent=1 // pred_check_branch
      %132 = sbr.rel (0) target = $region77
    $region76: #{tpu_custom_call.1} parent=1 // pred_region
      %133 = dma.done [#allocation3], 128
    $region77: #{tpu_custom_call.1} parent=1 // pred_fallthru
      _
    // Predicated region
    $region78: #{tpu_custom_call.1} parent=1 // pred_check
      _
    $region79: #{tpu_custom_call.1} parent=1 // pred_check_branch
      %135 = sbr.rel (0) target = $region81
    $region80: #{tpu_custom_call.1} parent=1 // pred_region
      %136 = dma.done [#allocation5], 16
    $region81: #{tpu_custom_call.1} parent=1 // pred_fallthru
      _
    // Predicated region
    $region82: #{tpu_custom_call.1} parent=1 // pred_check
      _
    $region83: #{tpu_custom_call.1} parent=1 // pred_check_branch
      %138 = sbr.rel (0) target = $region85
    $region84: #{tpu_custom_call.1} parent=1 // pred_region
      %139 = dma.done [#allocation5], 512
    $region85: #{tpu_custom_call.1} parent=1 // pred_fallthru
      _
    // Predicated region
    $region86: #{tpu_custom_call.1} parent=1 // pred_check
      _
    $region87: #{tpu_custom_call.1} parent=1 // pred_check_branch
      %141 = sbr.rel (0) target = $region89
    $region88: #{tpu_custom_call.1} parent=1 // pred_region
      %142 = dma.done [#allocation8], 512
    $region89: #{tpu_custom_call.1} parent=1 // pred_fallthru
      _
    // Predicated region
    $region90: #{tpu_custom_call.1} parent=1 // pred_check
      _
    $region91: #{tpu_custom_call.1} parent=1 // pred_check_branch
      %144 = sbr.rel (0) target = $region93
    $region92: #{tpu_custom_call.1} parent=1 // pred_region
      %145 = dma.done [#allocation8], 1024
    $region93: #{tpu_custom_call.1} parent=1 // pred_fallthru
      _
    // Predicated region
    $region94: #{tpu_custom_call.1} parent=1 // pred_check
      _
    $region95: #{tpu_custom_call.1} parent=1 // pred_check_branch
      %147 = sbr.rel (0) target = $region97
    $region96: #{tpu_custom_call.1} parent=1 // pred_region
      %148 = dma.done [#allocation11], 1024
    $region97: #{tpu_custom_call.1} parent=1 // pred_fallthru
      _
    // Predicated region
    $region98: #{tpu_custom_call.1} parent=1 // pred_check
      _
    $region99: #{tpu_custom_call.1} parent=1 // pred_check_branch
      %150 = sbr.rel (0) target = $region101
    $region100: #{tpu_custom_call.1} parent=1 // pred_region
      %151 = dma.done [#allocation11], 1024
    $region101: #{tpu_custom_call.1} parent=1 // pred_fallthru
      _
    %v153 = vld [vmem:[%s0] sm:$0xff]
    %v154 = vld [vmem:[#allocation2] sm:$0xf]
    %v155 = vld [vmem:[#allocation2 + $0x4] sm:$0xf]
    %v156 = vpack.c.bf16 %v153, %v153
    %v157 = vld [vmem:[%s2] sm:$0x1]
    %v159 = vlaneseq
    %v160 = vshrl.u32 %v159, 7
    %v161 = vsub.s32 0, %v160
    %v162 = vrot.slane %v157, %v161
    %v166 = vunpack.c.l.b16 %v154
    %v167 = vunpack.c.l.b16 %v155
    %v168 = vpack.c.b16 %v167, %v166
    %vm170 = vcmask 130048
    %v172 = vsel %vm170, %v156, 0
    %174 = vmatprep.subr.bf16.mxu0 0
    %175 = vmatpush1.bf16.msra.mxu0 %v168
    %176 = vmatprep.subr.bf16.mxu0 0
    %177 = vmatpush1.bf16.msra.mxu0 0
    %178 = vmatprep.subr.bf16.mxu0 0
    %179 = vmatpush1.bf16.msra.mxu0 0
    %180 = vmatprep.subr.bf16.mxu0 0
    %181 = vmatpush1.bf16.msra.mxu0 0
    %182 = vmatprep.subr.bf16.mxu0 0
    %183 = vmatpush1.bf16.msra.mxu0 0
    %184 = vmatprep.subr.bf16.mxu0 0
    %185 = vmatpush1.bf16.msra.mxu0 0
    %186 = vmatprep.subr.bf16.mxu0 0
    %187 = vmatpush1.bf16.msra.mxu0 0
    %188 = vmatprep.subr.bf16.mxu0 0
    %189 = vmatpush1.bf16.msra.mxu0 0
    %190 = vmatprep.subr.bf16.mxu0 0
    %191 = vmatpush1.bf16.msra.mxu0 0
    %192 = vmatprep.subr.bf16.mxu0 0
    %193 = vmatpush1.bf16.msra.mxu0 0
    %194 = vmatprep.subr.bf16.mxu0 0
    %195 = vmatpush1.bf16.msra.mxu0 0
    %196 = vmatprep.subr.bf16.mxu0 0
    %197 = vmatpush1.bf16.msra.mxu0 0
    %198 = vmatprep.subr.bf16.mxu0 0
    %199 = vmatpush1.bf16.msra.mxu0 0
    %200 = vmatprep.subr.bf16.mxu0 0
    %201 = vmatpush1.bf16.msra.mxu0 0
    %202 = vmatprep.subr.bf16.mxu0 0
    %203 = vmatpush1.bf16.msra.mxu0 0
    %204 = vmatprep.subr.bf16.mxu0 0
    %205 = vmatpush1.bf16.msra.mxu0 0
    %206 = vmatprep.mubr.bf16.mxu0 0
    %207 = vmatmul.mubr.bf16.gmra.mrb[0].mxu0 %v172
    %v208 = vpop.f32.mrb[0].mxu0
    %v209 = vadd.f32 %v162, %v208
    %v210 = vpop.f32.mrb[0].mxu0
    %v211 = vpop.f32.mrb[0].mxu0
    %v212 = vpop.f32.mrb[0].mxu0
    %213 = vdwg.mxu0
    %v214 = vmax.f32 %v209, 0.0
    %v215 = vld [vmem:[%s3] sm:$0xf]
    %v216 = vld [vmem:[%s3 + $0x4] sm:$0xf]
    %v217 = vld [vmem:[%s3 + $0x8] sm:$0xf]
    %v218 = vld [vmem:[%s3 + $0xc] sm:$0xf]
    %v219 = vld [vmem:[%s3 + $0x10] sm:$0xf]
    %v220 = vld [vmem:[%s3 + $0x14] sm:$0xf]
    %v221 = vld [vmem:[%s3 + $0x18] sm:$0xf]
    %v222 = vld [vmem:[%s3 + $0x1c] sm:$0xf]
    %v223 = vld [vmem:[%s3 + $0x20] sm:$0xf]
    %v224 = vld [vmem:[%s3 + $0x24] sm:$0xf]
    %v225 = vld [vmem:[%s3 + $0x28] sm:$0xf]
    %v226 = vld [vmem:[%s3 + $0x2c] sm:$0xf]
    %v227 = vld [vmem:[%s3 + $0x30] sm:$0xf]
    %v228 = vld [vmem:[%s3 + $0x34] sm:$0xf]
    %v229 = vld [vmem:[%s3 + $0x38] sm:$0xf]
    %v230 = vld [vmem:[%s3 + $0x3c] sm:$0xf]
    %v231 = vpack.c.bf16 %v214, %v214
    %v232 = vld [vmem:[#allocation4] sm:$0x1]
    %v234 = vlaneseq
    %v235 = vshrl.u32 %v234, 7
    %v236 = vsub.s32 0, %v235
    %v237 = vrot.slane %v232, %v236
    %v255 = vunpack.c.l.b16 %v215
    %v256 = vunpack.c.l.b16 %v216
    %v257 = vunpack.c.l.b16 %v217
    %v258 = vunpack.c.l.b16 %v218
    %v259 = vunpack.c.l.b16 %v219
    %v260 = vunpack.c.l.b16 %v220
    %v261 = vunpack.c.l.b16 %v221
    %v262 = vunpack.c.l.b16 %v222
    %v263 = vunpack.c.l.b16 %v223
    %v264 = vunpack.c.l.b16 %v224
    %v265 = vunpack.c.l.b16 %v225
    %v266 = vunpack.c.l.b16 %v226
    %v267 = vunpack.c.l.b16 %v227
    %v268 = vunpack.c.l.b16 %v228
    %v269 = vunpack.c.l.b16 %v229
    %v270 = vunpack.c.l.b16 %v230
    %v271 = vpack.c.b16 %v256, %v255
    %v272 = vpack.c.b16 %v258, %v257
    %v273 = vpack.c.b16 %v260, %v259
    %v274 = vpack.c.b16 %v262, %v261
    %v275 = vpack.c.b16 %v264, %v263
    %v276 = vpack.c.b16 %v266, %v265
    %v277 = vpack.c.b16 %v268, %v267
    %v278 = vpack.c.b16 %v270, %v269
    %287 = vmatprep.subr.bf16.mxu0 0
    %288 = vmatpush1.bf16.msra.mxu0 %v271
    %289 = vmatprep.subr.bf16.mxu0 0
    %290 = vmatpush1.bf16.msra.mxu0 %v272
    %291 = vmatprep.subr.bf16.mxu0 0
    %292 = vmatpush1.bf16.msra.mxu0 %v273
    %293 = vmatprep.subr.bf16.mxu0 0
    %294 = vmatpush1.bf16.msra.mxu0 %v274
    %295 = vmatprep.subr.bf16.mxu0 0
    %296 = vmatpush1.bf16.msra.mxu0 %v275
    %297 = vmatprep.subr.bf16.mxu0 0
    %298 = vmatpush1.bf16.msra.mxu0 %v276
    %299 = vmatprep.subr.bf16.mxu0 0
    %300 = vmatpush1.bf16.msra.mxu0 %v277
    %301 = vmatprep.subr.bf16.mxu0 0
    %302 = vmatpush1.bf16.msra.mxu0 %v278
    %303 = vmatprep.subr.bf16.mxu0 0
    %304 = vmatpush1.bf16.msra.mxu0 0
    %305 = vmatprep.subr.bf16.mxu0 0
    %306 = vmatpush1.bf16.msra.mxu0 0
    %307 = vmatprep.subr.bf16.mxu0 0
    %308 = vmatpush1.bf16.msra.mxu0 0
    %309 = vmatprep.subr.bf16.mxu0 0
    %310 = vmatpush1.bf16.msra.mxu0 0
    %311 = vmatprep.subr.bf16.mxu0 0
    %312 = vmatpush1.bf16.msra.mxu0 0
    %313 = vmatprep.subr.bf16.mxu0 0
    %314 = vmatpush1.bf16.msra.mxu0 0
    %315 = vmatprep.subr.bf16.mxu0 0
    %316 = vmatpush1.bf16.msra.mxu0 0
    %317 = vmatprep.subr.bf16.mxu0 0
    %318 = vmatpush1.bf16.msra.mxu0 0
    %319 = vmatprep.mubr.bf16.mxu0 0
    %320 = vmatmul.mubr.bf16.gmra.mrb[0].mxu0 %v231
    %v321 = vpop.f32.mrb[0].mxu0
    %v322 = vadd.f32 %v237, %v321
    %v323 = vpop.f32.mrb[0].mxu0
    %v324 = vpop.f32.mrb[0].mxu0
    %v325 = vpop.f32.mrb[0].mxu0
    %326 = vdwg.mxu0
    %v327 = vmax.f32 %v322, 0.0
    %329 = vrot.lane.b32.xlu0 %v327, 96
    %v330 = vpop.permute.xlu0 %329
    %332 = vrot.lane.b32.xlu0 %v327, 64
    %v333 = vpop.permute.xlu0 %332
    %335 = vrot.lane.b32.xlu0 %v327, 32
    %v336 = vpop.permute.xlu0 %335
    %v338 = vld [vmem:[#allocation6] sm:$0xff]
    %v339 = vld [vmem:[#allocation6 + $0x8] sm:$0xff]
    %v340 = vld [vmem:[#allocation6 + $0x10] sm:$0xff]
    %v341 = vld [vmem:[#allocation6 + $0x18] sm:$0xff]
    %v342 = vpack.c.bf16 %v330, %v327
    %v343 = vpack.c.bf16 %v336, %v333
    %v344 = vld [vmem:[#allocation7] sm:$0xff]
    %v345 = vld [vmem:[#allocation7 + $0x8] sm:$0xff]
    %v346 = vld [vmem:[#allocation7 + $0x10] sm:$0xff]
    %v347 = vld [vmem:[#allocation7 + $0x18] sm:$0xff]
    %v348 = vpack.c.bf16 %v336, %v327
    %v349 = vpack.c.bf16 %v330, %v333
    %352 = vrot.lane.b32.xlu0 %v348, 32
    %v353 = vpop.permute.xlu0 %352
    %354 = vrot.lane.b32.xlu0 %v349, 32
    %v355 = vpop.permute.xlu0 %354
    %v360 = vunpack.c.l.b16 %v344
    %v361 = vunpack.c.h.b16 %v344
    %v362 = vunpack.c.l.b16 %v345
    %v363 = vunpack.c.h.b16 %v345
    %v364 = vunpack.c.l.b16 %v346
    %v365 = vunpack.c.h.b16 %v346
    %v366 = vunpack.c.l.b16 %v347
    %v367 = vunpack.c.h.b16 %v347
    %v368 = vpack.c.b16 %v362, %v360
    %v369 = vpack.c.b16 %v363, %v361
    %v370 = vpack.c.b16 %v366, %v364
    %v371 = vpack.c.b16 %v367, %v365
    %vm376 = vcmask 261120
    %v378 = vsel %vm376, %v353, 0
    %v381 = vsel %vm376, %v355, 0
    %383 = vmatprep.subr.bf16.mxu0 %v369
    %384 = vmatpush1.bf16.msra.mxu0 %v368
    %385 = vmatprep.subr.bf16.mxu0 %v371
    %386 = vmatpush1.bf16.msra.mxu0 %v370
    %387 = vmatprep.subr.bf16.mxu0 0
    %388 = vmatpush1.bf16.msra.mxu0 0
    %389 = vmatprep.subr.bf16.mxu0 0
    %390 = vmatpush1.bf16.msra.mxu0 0
    %391 = vmatprep.subr.bf16.mxu0 0
    %392 = vmatpush1.bf16.msra.mxu0 0
    %393 = vmatprep.subr.bf16.mxu0 0
    %394 = vmatpush1.bf16.msra.mxu0 0
    %395 = vmatprep.subr.bf16.mxu0 0
    %396 = vmatpush1.bf16.msra.mxu0 0
    %397 = vmatprep.subr.bf16.mxu0 0
    %398 = vmatpush1.bf16.msra.mxu0 0
    %399 = vmatprep.subr.bf16.mxu0 0
    %400 = vmatpush1.bf16.msra.mxu0 0
    %401 = vmatprep.subr.bf16.mxu0 0
    %402 = vmatpush1.bf16.msra.mxu0 0
    %403 = vmatprep.subr.bf16.mxu0 0
    %404 = vmatpush1.bf16.msra.mxu0 0
    %405 = vmatprep.subr.bf16.mxu0 0
    %406 = vmatpush1.bf16.msra.mxu0 0
    %407 = vmatprep.subr.bf16.mxu0 0
    %408 = vmatpush1.bf16.msra.mxu0 0
    %409 = vmatprep.subr.bf16.mxu0 0
    %410 = vmatpush1.bf16.msra.mxu0 0
    %411 = vmatprep.subr.bf16.mxu0 0
    %412 = vmatpush1.bf16.msra.mxu0 0
    %413 = vmatprep.subr.bf16.mxu0 0
    %414 = vmatpush1.bf16.msra.mxu0 0
    %415 = vmatprep.mubr.bf16.mxu0 0
    %416 = vmatmul.mubr.bf16.gmra.mrb[0].mxu0 %v378
    %v417 = vpop.f32.mrb[0].mxu0
    %v418 = vadd.f32 0.0, %v417
    %v419 = vpop.f32.mrb[0].mxu0
    %v420 = vadd.f32 0.0, %v419
    %v421 = vpop.f32.mrb[0].mxu0
    %v422 = vadd.f32 0.0, %v421
    %v423 = vpop.f32.mrb[0].mxu0
    %v424 = vadd.f32 0.0, %v423
    %425 = vmatprep.mubr.bf16.mxu0 0
    %426 = vmatmul.mubr.bf16.gmra.mrb[0].mxu0 %v381
    %v427 = vpop.f32.mrb[0].mxu0
    %v428 = vadd.f32 0.0, %v427
    %v429 = vpop.f32.mrb[0].mxu0
    %v430 = vadd.f32 0.0, %v429
    %v431 = vpop.f32.mrb[0].mxu0
    %v432 = vadd.f32 0.0, %v431
    %v433 = vpop.f32.mrb[0].mxu0
    %v434 = vadd.f32 0.0, %v433
    %435 = vdwg.mxu0
    %v440 = vunpack.c.l.b16 %v338
    %v441 = vunpack.c.h.b16 %v338
    %v442 = vunpack.c.l.b16 %v339
    %v443 = vunpack.c.h.b16 %v339
    %v444 = vunpack.c.l.b16 %v340
    %v445 = vunpack.c.h.b16 %v340
    %v446 = vunpack.c.l.b16 %v341
    %v447 = vunpack.c.h.b16 %v341
    %v448 = vpack.c.b16 %v442, %v440
    %v449 = vpack.c.b16 %v443, %v441
    %v450 = vpack.c.b16 %v446, %v444
    %v451 = vpack.c.b16 %v447, %v445
    %v457 = vsel %vm376, %v342, 0
    %v460 = vsel %vm376, %v343, 0
    %462 = vmatprep.subr.bf16.mxu0 %v449
    %463 = vmatpush1.bf16.msra.mxu0 %v448
    %464 = vmatprep.subr.bf16.mxu0 %v451
    %465 = vmatpush1.bf16.msra.mxu0 %v450
    %466 = vmatprep.subr.bf16.mxu0 0
    %467 = vmatpush1.bf16.msra.mxu0 0
    %468 = vmatprep.subr.bf16.mxu0 0
    %469 = vmatpush1.bf16.msra.mxu0 0
    %470 = vmatprep.subr.bf16.mxu0 0
    %471 = vmatpush1.bf16.msra.mxu0 0
    %472 = vmatprep.subr.bf16.mxu0 0
    %473 = vmatpush1.bf16.msra.mxu0 0
    %474 = vmatprep.subr.bf16.mxu0 0
    %475 = vmatpush1.bf16.msra.mxu0 0
    %476 = vmatprep.subr.bf16.mxu0 0
    %477 = vmatpush1.bf16.msra.mxu0 0
    %478 = vmatprep.subr.bf16.mxu0 0
    %479 = vmatpush1.bf16.msra.mxu0 0
    %480 = vmatprep.subr.bf16.mxu0 0
    %481 = vmatpush1.bf16.msra.mxu0 0
    %482 = vmatprep.subr.bf16.mxu0 0
    %483 = vmatpush1.bf16.msra.mxu0 0
    %484 = vmatprep.subr.bf16.mxu0 0
    %485 = vmatpush1.bf16.msra.mxu0 0
    %486 = vmatprep.subr.bf16.mxu0 0
    %487 = vmatpush1.bf16.msra.mxu0 0
    %488 = vmatprep.subr.bf16.mxu0 0
    %489 = vmatpush1.bf16.msra.mxu0 0
    %490 = vmatprep.subr.bf16.mxu0 0
    %491 = vmatpush1.bf16.msra.mxu0 0
    %492 = vmatprep.subr.bf16.mxu0 0
    %493 = vmatpush1.bf16.msra.mxu0 0
    %494 = vmatprep.mubr.bf16.mxu0 0
    %495 = vmatmul.mubr.bf16.gmra.mrb[0].mxu0 %v457
    %v496 = vpop.f32.mrb[0].mxu0
    %v497 = vadd.f32 %v418, %v496
    %v498 = vpop.f32.mrb[0].mxu0
    %v499 = vadd.f32 %v420, %v498
    %v500 = vpop.f32.mrb[0].mxu0
    %v501 = vadd.f32 %v422, %v500
    %v502 = vpop.f32.mrb[0].mxu0
    %v503 = vadd.f32 %v424, %v502
    %504 = vmatprep.mubr.bf16.mxu0 0
    %505 = vmatmul.mubr.bf16.gmra.mrb[0].mxu0 %v460
    %v506 = vpop.f32.mrb[0].mxu0
    %v507 = vadd.f32 %v428, %v506
    %v508 = vpop.f32.mrb[0].mxu0
    %v509 = vadd.f32 %v430, %v508
    %v510 = vpop.f32.mrb[0].mxu0
    %v511 = vadd.f32 %v432, %v510
    %v512 = vpop.f32.mrb[0].mxu0
    %v513 = vadd.f32 %v434, %v512
    %514 = vdwg.mxu0
    %v515 = vld [vmem:[%s7] sm:$0x3]
    %v517 = vlaneseq
    %v518 = vshrl.u32 %v517, 7
    %v519 = vsub.s32 0, %v518
    %v520 = vrot.slane %v515, %v519
    %v521 = vlaneseq
    %v522 = vshrl.u32 %v521, 7
    %v523 = vsub.s32 1, %v522
    %v524 = vrot.slane %v515, %v523
    %v527 = vadd.f32 %v497, %v520
    %v528 = vadd.f32 %v499, %v524
    %v529 = vadd.f32 %v501, %v520
    %v530 = vadd.f32 %v503, %v524
    %v531 = vadd.f32 %v507, %v520
    %v532 = vadd.f32 %v509, %v524
    %v533 = vadd.f32 %v511, %v520
    %v534 = vadd.f32 %v513, %v524
    %v535 = vld [vmem:[%s8] sm:$0xff]
    %v536 = vld [vmem:[%s8 + $0x8] sm:$0xff]
    %v537 = vld [vmem:[%s8 + $0x10] sm:$0xff]
    %v538 = vld [vmem:[%s8 + $0x18] sm:$0xff]
    %v539 = vld [vmem:[%s8 + $0x20] sm:$0xff]
    %v540 = vld [vmem:[%s8 + $0x28] sm:$0xff]
    %v541 = vld [vmem:[%s8 + $0x30] sm:$0xff]
    %v542 = vld [vmem:[%s8 + $0x38] sm:$0xff]
    %v543 = vld [vmem:[%s9] sm:$0x3]
    %v545 = vlaneseq
    %v546 = vshrl.u32 %v545, 7
    %v547 = vsub.s32 0, %v546
    %v548 = vrot.slane %v543, %v547
    %v549 = vlaneseq
    %v550 = vshrl.u32 %v549, 7
    %v551 = vsub.s32 1, %v550
    %v552 = vrot.slane %v543, %v551
    %v563 = vunpack.c.l.b16 %v535
    %v564 = vunpack.c.h.b16 %v535
    %v565 = vunpack.c.l.b16 %v536
    %v566 = vunpack.c.h.b16 %v536
    %v567 = vunpack.c.l.b16 %v537
    %v568 = vunpack.c.h.b16 %v537
    %v569 = vunpack.c.l.b16 %v538
    %v570 = vunpack.c.h.b16 %v538
    %v571 = vunpack.c.l.b16 %v539
    %v572 = vunpack.c.h.b16 %v539
    %v573 = vunpack.c.l.b16 %v540
    %v574 = vunpack.c.h.b16 %v540
    %v575 = vunpack.c.l.b16 %v541
    %v576 = vunpack.c.h.b16 %v541
    %v577 = vunpack.c.l.b16 %v542
    %v578 = vunpack.c.h.b16 %v542
    %v579 = vpack.c.b16 %v565, %v563
    %v580 = vpack.c.b16 %v566, %v564
    %v581 = vpack.c.b16 %v569, %v567
    %v582 = vpack.c.b16 %v570, %v568
    %v583 = vpack.c.b16 %v573, %v571
    %v584 = vpack.c.b16 %v574, %v572
    %v585 = vpack.c.b16 %v577, %v575
    %v586 = vpack.c.b16 %v578, %v576
    %vm595 = vcmask 523264
    %v597 = vsel %vm595, 0, 0
    %599 = vmatprep.subr.bf16.mxu0 %v580
    %600 = vmatpush1.bf16.msra.mxu0 %v579
    %601 = vmatprep.subr.bf16.mxu0 %v582
    %602 = vmatpush1.bf16.msra.mxu0 %v581
    %603 = vmatprep.subr.bf16.mxu0 %v584
    %604 = vmatpush1.bf16.msra.mxu0 %v583
    %605 = vmatprep.subr.bf16.mxu0 %v586
    %606 = vmatpush1.bf16.msra.mxu0 %v585
    %607 = vmatprep.subr.bf16.mxu0 0
    %608 = vmatpush1.bf16.msra.mxu0 0
    %609 = vmatprep.subr.bf16.mxu0 0
    %610 = vmatpush1.bf16.msra.mxu0 0
    %611 = vmatprep.subr.bf16.mxu0 0
    %612 = vmatpush1.bf16.msra.mxu0 0
    %613 = vmatprep.subr.bf16.mxu0 0
    %614 = vmatpush1.bf16.msra.mxu0 0
    %615 = vmatprep.subr.bf16.mxu0 0
    %616 = vmatpush1.bf16.msra.mxu0 0
    %617 = vmatprep.subr.bf16.mxu0 0
    %618 = vmatpush1.bf16.msra.mxu0 0
    %619 = vmatprep.subr.bf16.mxu0 0
    %620 = vmatpush1.bf16.msra.mxu0 0
    %621 = vmatprep.subr.bf16.mxu0 0
    %622 = vmatpush1.bf16.msra.mxu0 0
    %623 = vmatprep.subr.bf16.mxu0 0
    %624 = vmatpush1.bf16.msra.mxu0 0
    %625 = vmatprep.subr.bf16.mxu0 0
    %626 = vmatpush1.bf16.msra.mxu0 0
    %627 = vmatprep.subr.bf16.mxu0 0
    %628 = vmatpush1.bf16.msra.mxu0 0
    %629 = vmatprep.subr.bf16.mxu0 0
    %630 = vmatpush1.bf16.msra.mxu0 0
    %631 = vmatprep.mubr.bf16.mxu0 0
    %632 = vmatmul.mubr.bf16.gmra.mrb[0].mxu0 %v597
    %v633 = vpop.f32.mrb[0].mxu0
    %v634 = vadd.f32 %v548, %v633
    %v635 = vpop.f32.mrb[0].mxu0
    %v636 = vadd.f32 %v552, %v635
    %v637 = vpop.f32.mrb[0].mxu0
    %v638 = vpop.f32.mrb[0].mxu0
    %639 = vdwg.mxu0
    %v640 = vadd.f32 %v527, %v634
    %v641 = vmul.f32 %v640, 0.5
    %v642 = vtanh.pop %v641
    %v643 = vadd.f32 %v642, 1.0
    %v644 = vmul.f32 %v643, 0.5
    %v645 = vmul.f32 %v644, %v636
    %v646 = vadd.f32 %v528, %v645
    %v647 = vtanh.pop %v646
    %v648 = vsub.f32 1.0, %v644
    %650 = vrot.lane.b32.xlu0 %v647, 64
    %v651 = vpop.permute.xlu0 %650
    %v653 = vmul.f32 %v648, %v651
    %v654 = vmul.f32 %v644, 0.0
    %v655 = vadd.f32 %v653, %v654
    %v656 = vpack.c.bf16 %v655, %v655
    %658 = vrot.lane.b32.xlu0 %v656, 64
    %v659 = vpop.permute.xlu0 %658
    %v661 = vsel %vm595, %v659, 0
    %663 = vmatprep.subr.bf16.mxu0 %v580
    %664 = vmatpush1.bf16.msra.mxu0 %v579
    %665 = vmatprep.subr.bf16.mxu0 %v582
    %666 = vmatpush1.bf16.msra.mxu0 %v581
    %667 = vmatprep.subr.bf16.mxu0 %v584
    %668 = vmatpush1.bf16.msra.mxu0 %v583
    %669 = vmatprep.subr.bf16.mxu0 %v586
    %670 = vmatpush1.bf16.msra.mxu0 %v585
    %671 = vmatprep.subr.bf16.mxu0 0
    %672 = vmatpush1.bf16.msra.mxu0 0
    %673 = vmatprep.subr.bf16.mxu0 0
    %674 = vmatpush1.bf16.msra.mxu0 0
    %675 = vmatprep.subr.bf16.mxu0 0
    %676 = vmatpush1.bf16.msra.mxu0 0
    %677 = vmatprep.subr.bf16.mxu0 0
    %678 = vmatpush1.bf16.msra.mxu0 0
    %679 = vmatprep.subr.bf16.mxu0 0
    %680 = vmatpush1.bf16.msra.mxu0 0
    %681 = vmatprep.subr.bf16.mxu0 0
    %682 = vmatpush1.bf16.msra.mxu0 0
    %683 = vmatprep.subr.bf16.mxu0 0
    %684 = vmatpush1.bf16.msra.mxu0 0
    %685 = vmatprep.subr.bf16.mxu0 0
    %686 = vmatpush1.bf16.msra.mxu0 0
    %687 = vmatprep.subr.bf16.mxu0 0
    %688 = vmatpush1.bf16.msra.mxu0 0
    %689 = vmatprep.subr.bf16.mxu0 0
    %690 = vmatpush1.bf16.msra.mxu0 0
    %691 = vmatprep.subr.bf16.mxu0 0
    %692 = vmatpush1.bf16.msra.mxu0 0
    %693 = vmatprep.subr.bf16.mxu0 0
    %694 = vmatpush1.bf16.msra.mxu0 0
    %695 = vmatprep.mubr.bf16.mxu0 0
    %696 = vmatmul.mubr.bf16.gmra.mrb[0].mxu0 %v661
    %v697 = vpop.f32.mrb[0].mxu0
    %v698 = vadd.f32 %v548, %v697
    %v699 = vpop.f32.mrb[0].mxu0
    %v700 = vadd.f32 %v552, %v699
    %v701 = vpop.f32.mrb[0].mxu0
    %v702 = vpop.f32.mrb[0].mxu0
    %703 = vdwg.mxu0
    %v704 = vadd.f32 %v529, %v698
    %v705 = vmul.f32 %v704, 0.5
    %v706 = vtanh.pop %v705
    %v707 = vadd.f32 %v706, 1.0
    %v708 = vmul.f32 %v707, 0.5
    %v709 = vmul.f32 %v708, %v700
    %v710 = vadd.f32 %v530, %v709
    %v711 = vtanh.pop %v710
    %v712 = vsub.f32 1.0, %v708
    %714 = vrot.lane.b32.xlu0 %v711, 64
    %v715 = vpop.permute.xlu0 %714
    %v717 = vmul.f32 %v712, %v715
    %v718 = vmul.f32 %v708, %v655
    %v719 = vadd.f32 %v717, %v718
    %v720 = vpack.c.bf16 %v719, %v719
    %722 = vrot.lane.b32.xlu0 %v720, 64
    %v723 = vpop.permute.xlu0 %722
    %v725 = vsel %vm595, %v723, 0
    %727 = vmatprep.subr.bf16.mxu0 %v580
    %728 = vmatpush1.bf16.msra.mxu0 %v579
    %729 = vmatprep.subr.bf16.mxu0 %v582
    %730 = vmatpush1.bf16.msra.mxu0 %v581
    %731 = vmatprep.subr.bf16.mxu0 %v584
    %732 = vmatpush1.bf16.msra.mxu0 %v583
    %733 = vmatprep.subr.bf16.mxu0 %v586
    %734 = vmatpush1.bf16.msra.mxu0 %v585
    %735 = vmatprep.subr.bf16.mxu0 0
    %736 = vmatpush1.bf16.msra.mxu0 0
    %737 = vmatprep.subr.bf16.mxu0 0
    %738 = vmatpush1.bf16.msra.mxu0 0
    %739 = vmatprep.subr.bf16.mxu0 0
    %740 = vmatpush1.bf16.msra.mxu0 0
    %741 = vmatprep.subr.bf16.mxu0 0
    %742 = vmatpush1.bf16.msra.mxu0 0
    %743 = vmatprep.subr.bf16.mxu0 0
    %744 = vmatpush1.bf16.msra.mxu0 0
    %745 = vmatprep.subr.bf16.mxu0 0
    %746 = vmatpush1.bf16.msra.mxu0 0
    %747 = vmatprep.subr.bf16.mxu0 0
    %748 = vmatpush1.bf16.msra.mxu0 0
    %749 = vmatprep.subr.bf16.mxu0 0
    %750 = vmatpush1.bf16.msra.mxu0 0
    %751 = vmatprep.subr.bf16.mxu0 0
    %752 = vmatpush1.bf16.msra.mxu0 0
    %753 = vmatprep.subr.bf16.mxu0 0
    %754 = vmatpush1.bf16.msra.mxu0 0
    %755 = vmatprep.subr.bf16.mxu0 0
    %756 = vmatpush1.bf16.msra.mxu0 0
    %757 = vmatprep.subr.bf16.mxu0 0
    %758 = vmatpush1.bf16.msra.mxu0 0
    %759 = vmatprep.mubr.bf16.mxu0 0
    %760 = vmatmul.mubr.bf16.gmra.mrb[0].mxu0 %v725
    %v761 = vpop.f32.mrb[0].mxu0
    %v762 = vadd.f32 %v548, %v761
    %v763 = vpop.f32.mrb[0].mxu0
    %v764 = vadd.f32 %v552, %v763
    %v765 = vpop.f32.mrb[0].mxu0
    %v766 = vpop.f32.mrb[0].mxu0
    %767 = vdwg.mxu0
    %v768 = vadd.f32 %v531, %v762
    %v769 = vmul.f32 %v768, 0.5
    %v770 = vtanh.pop %v769
    %v771 = vadd.f32 %v770, 1.0
    %v772 = vmul.f32 %v771, 0.5
    %v773 = vmul.f32 %v772, %v764
    %v774 = vadd.f32 %v532, %v773
    %v775 = vtanh.pop %v774
    %v776 = vsub.f32 1.0, %v772
    %778 = vrot.lane.b32.xlu0 %v775, 64
    %v779 = vpop.permute.xlu0 %778
    %v781 = vmul.f32 %v776, %v779
    %v782 = vmul.f32 %v772, %v719
    %v783 = vadd.f32 %v781, %v782
    %v784 = vpack.c.bf16 %v783, %v783
    %786 = vrot.lane.b32.xlu0 %v784, 64
    %v787 = vpop.permute.xlu0 %786
    %v789 = vsel %vm595, %v787, 0
    %791 = vmatprep.subr.bf16.mxu0 %v580
    %792 = vmatpush1.bf16.msra.mxu0 %v579
    %793 = vmatprep.subr.bf16.mxu0 %v582
    %794 = vmatpush1.bf16.msra.mxu0 %v581
    %795 = vmatprep.subr.bf16.mxu0 %v584
    %796 = vmatpush1.bf16.msra.mxu0 %v583
    %797 = vmatprep.subr.bf16.mxu0 %v586
    %798 = vmatpush1.bf16.msra.mxu0 %v585
    %799 = vmatprep.subr.bf16.mxu0 0
    %800 = vmatpush1.bf16.msra.mxu0 0
    %801 = vmatprep.subr.bf16.mxu0 0
    %802 = vmatpush1.bf16.msra.mxu0 0
    %803 = vmatprep.subr.bf16.mxu0 0
    %804 = vmatpush1.bf16.msra.mxu0 0
    %805 = vmatprep.subr.bf16.mxu0 0
    %806 = vmatpush1.bf16.msra.mxu0 0
    %807 = vmatprep.subr.bf16.mxu0 0
    %808 = vmatpush1.bf16.msra.mxu0 0
    %809 = vmatprep.subr.bf16.mxu0 0
    %810 = vmatpush1.bf16.msra.mxu0 0
    %811 = vmatprep.subr.bf16.mxu0 0
    %812 = vmatpush1.bf16.msra.mxu0 0
    %813 = vmatprep.subr.bf16.mxu0 0
    %814 = vmatpush1.bf16.msra.mxu0 0
    %815 = vmatprep.subr.bf16.mxu0 0
    %816 = vmatpush1.bf16.msra.mxu0 0
    %817 = vmatprep.subr.bf16.mxu0 0
    %818 = vmatpush1.bf16.msra.mxu0 0
    %819 = vmatprep.subr.bf16.mxu0 0
    %820 = vmatpush1.bf16.msra.mxu0 0
    %821 = vmatprep.subr.bf16.mxu0 0
    %822 = vmatpush1.bf16.msra.mxu0 0
    %823 = vmatprep.mubr.bf16.mxu0 0
    %824 = vmatmul.mubr.bf16.gmra.mrb[0].mxu0 %v789
    %v825 = vpop.f32.mrb[0].mxu0
    %v826 = vadd.f32 %v548, %v825
    %v827 = vpop.f32.mrb[0].mxu0
    %v828 = vadd.f32 %v552, %v827
    %v829 = vpop.f32.mrb[0].mxu0
    %v830 = vpop.f32.mrb[0].mxu0
    %831 = vdwg.mxu0
    %v832 = vadd.f32 %v533, %v826
    %v833 = vmul.f32 %v832, 0.5
    %v834 = vtanh.pop %v833
    %v835 = vadd.f32 %v834, 1.0
    %v836 = vmul.f32 %v835, 0.5
    %v837 = vmul.f32 %v836, %v828
    %v838 = vadd.f32 %v534, %v837
    %v839 = vtanh.pop %v838
    %v840 = vsub.f32 1.0, %v836
    %842 = vrot.lane.b32.xlu0 %v839, 64
    %v843 = vpop.permute.xlu0 %842
    %v845 = vmul.f32 %v840, %v843
    %v846 = vmul.f32 %v836, %v783
    %v847 = vadd.f32 %v845, %v846
    %v848 = vld [vmem:[#allocation9] sm:$0xff]
    %v849 = vld [vmem:[#allocation9 + $0x8] sm:$0xff]
    %v850 = vld [vmem:[#allocation9 + $0x10] sm:$0xff]
    %v851 = vld [vmem:[#allocation9 + $0x18] sm:$0xff]
    %v852 = vld [vmem:[#allocation9 + $0x20] sm:$0xff]
    %v853 = vld [vmem:[#allocation9 + $0x28] sm:$0xff]
    %v854 = vld [vmem:[#allocation9 + $0x30] sm:$0xff]
    %v855 = vld [vmem:[#allocation9 + $0x38] sm:$0xff]
    %v856 = vpack.c.bf16 %v719, %v655
    %v857 = vpack.c.bf16 %v847, %v783
    %v858 = vld [vmem:[#allocation10] sm:$0xff]
    %v859 = vld [vmem:[#allocation10 + $0x8] sm:$0xff]
    %v860 = vld [vmem:[#allocation10 + $0x10] sm:$0xff]
    %v861 = vld [vmem:[#allocation10 + $0x18] sm:$0xff]
    %v862 = vld [vmem:[#allocation10 + $0x20] sm:$0xff]
    %v863 = vld [vmem:[#allocation10 + $0x28] sm:$0xff]
    %v864 = vld [vmem:[#allocation10 + $0x30] sm:$0xff]
    %v865 = vld [vmem:[#allocation10 + $0x38] sm:$0xff]
    %v866 = vpack.c.bf16 %v783, %v847
    %v867 = vpack.c.bf16 %v655, %v719
    %870 = vrot.lane.b32.xlu0 %v866, 64
    %v871 = vpop.permute.xlu0 %870
    %872 = vrot.lane.b32.xlu0 %v867, 64
    %v873 = vpop.permute.xlu0 %872
    %v882 = vunpack.c.l.b16 %v858
    %v883 = vunpack.c.h.b16 %v858
    %v884 = vunpack.c.l.b16 %v859
    %v885 = vunpack.c.h.b16 %v859
    %v886 = vunpack.c.l.b16 %v860
    %v887 = vunpack.c.h.b16 %v860
    %v888 = vunpack.c.l.b16 %v861
    %v889 = vunpack.c.h.b16 %v861
    %v890 = vunpack.c.l.b16 %v862
    %v891 = vunpack.c.h.b16 %v862
    %v892 = vunpack.c.l.b16 %v863
    %v893 = vunpack.c.h.b16 %v863
    %v894 = vunpack.c.l.b16 %v864
    %v895 = vunpack.c.h.b16 %v864
    %v896 = vunpack.c.l.b16 %v865
    %v897 = vunpack.c.h.b16 %v865
    %v898 = vpack.c.b16 %v884, %v882
    %v899 = vpack.c.b16 %v885, %v883
    %v900 = vpack.c.b16 %v888, %v886
    %v901 = vpack.c.b16 %v889, %v887
    %v902 = vpack.c.b16 %v892, %v890
    %v903 = vpack.c.b16 %v893, %v891
    %v904 = vpack.c.b16 %v896, %v894
    %v905 = vpack.c.b16 %v897, %v895
    %v915 = vsel %vm595, %v871, 0
    %v918 = vsel %vm595, %v873, 0
    %920 = vmatprep.subr.bf16.mxu0 %v899
    %921 = vmatpush1.bf16.msra.mxu0 %v898
    %922 = vmatprep.subr.bf16.mxu0 %v901
    %923 = vmatpush1.bf16.msra.mxu0 %v900
    %924 = vmatprep.subr.bf16.mxu0 %v903
    %925 = vmatpush1.bf16.msra.mxu0 %v902
    %926 = vmatprep.subr.bf16.mxu0 %v905
    %927 = vmatpush1.bf16.msra.mxu0 %v904
    %928 = vmatprep.subr.bf16.mxu0 0
    %929 = vmatpush1.bf16.msra.mxu0 0
    %930 = vmatprep.subr.bf16.mxu0 0
    %931 = vmatpush1.bf16.msra.mxu0 0
    %932 = vmatprep.subr.bf16.mxu0 0
    %933 = vmatpush1.bf16.msra.mxu0 0
    %934 = vmatprep.subr.bf16.mxu0 0
    %935 = vmatpush1.bf16.msra.mxu0 0
    %936 = vmatprep.subr.bf16.mxu0 0
    %937 = vmatpush1.bf16.msra.mxu0 0
    %938 = vmatprep.subr.bf16.mxu0 0
    %939 = vmatpush1.bf16.msra.mxu0 0
    %940 = vmatprep.subr.bf16.mxu0 0
    %941 = vmatpush1.bf16.msra.mxu0 0
    %942 = vmatprep.subr.bf16.mxu0 0
    %943 = vmatpush1.bf16.msra.mxu0 0
    %944 = vmatprep.subr.bf16.mxu0 0
    %945 = vmatpush1.bf16.msra.mxu0 0
    %946 = vmatprep.subr.bf16.mxu0 0
    %947 = vmatpush1.bf16.msra.mxu0 0
    %948 = vmatprep.subr.bf16.mxu0 0
    %949 = vmatpush1.bf16.msra.mxu0 0
    %950 = vmatprep.subr.bf16.mxu0 0
    %951 = vmatpush1.bf16.msra.mxu0 0
    %952 = vmatprep.mubr.bf16.mxu0 0
    %953 = vmatmul.mubr.bf16.gmra.mrb[0].mxu0 %v915
    %v954 = vpop.f32.mrb[0].mxu0
    %v955 = vadd.f32 0.0, %v954
    %v956 = vpop.f32.mrb[0].mxu0
    %v957 = vadd.f32 0.0, %v956
    %v958 = vpop.f32.mrb[0].mxu0
    %v959 = vadd.f32 0.0, %v958
    %v960 = vpop.f32.mrb[0].mxu0
    %v961 = vadd.f32 0.0, %v960
    %962 = vmatprep.mubr.bf16.mxu0 0
    %963 = vmatmul.mubr.bf16.gmra.mrb[0].mxu0 %v918
    %v964 = vpop.f32.mrb[0].mxu0
    %v965 = vadd.f32 0.0, %v964
    %v966 = vpop.f32.mrb[0].mxu0
    %v967 = vadd.f32 0.0, %v966
    %v968 = vpop.f32.mrb[0].mxu0
    %v969 = vadd.f32 0.0, %v968
    %v970 = vpop.f32.mrb[0].mxu0
    %v971 = vadd.f32 0.0, %v970
    %972 = vdwg.mxu0
    %975 = vrot.lane.b32.xlu0 %v856, 64
    %v976 = vpop.permute.xlu0 %975
    %977 = vrot.lane.b32.xlu0 %v857, 64
    %v978 = vpop.permute.xlu0 %977
    %v987 = vunpack.c.l.b16 %v848
    %v988 = vunpack.c.h.b16 %v848
    %v989 = vunpack.c.l.b16 %v849
    %v990 = vunpack.c.h.b16 %v849
    %v991 = vunpack.c.l.b16 %v850
    %v992 = vunpack.c.h.b16 %v850
    %v993 = vunpack.c.l.b16 %v851
    %v994 = vunpack.c.h.b16 %v851
    %v995 = vunpack.c.l.b16 %v852
    %v996 = vunpack.c.h.b16 %v852
    %v997 = vunpack.c.l.b16 %v853
    %v998 = vunpack.c.h.b16 %v853
    %v999 = vunpack.c.l.b16 %v854
    %v1000 = vunpack.c.h.b16 %v854
    %v1001 = vunpack.c.l.b16 %v855
    %v1002 = vunpack.c.h.b16 %v855
    %v1003 = vpack.c.b16 %v989, %v987
    %v1004 = vpack.c.b16 %v990, %v988
    %v1005 = vpack.c.b16 %v993, %v991
    %v1006 = vpack.c.b16 %v994, %v992
    %v1007 = vpack.c.b16 %v997, %v995
    %v1008 = vpack.c.b16 %v998, %v996
    %v1009 = vpack.c.b16 %v1001, %v999
    %v1010 = vpack.c.b16 %v1002, %v1000
    %v1020 = vsel %vm595, %v976, 0
    %v1023 = vsel %vm595, %v978, 0
    %1025 = vmatprep.subr.bf16.mxu0 %v1004
    %1026 = vmatpush1.bf16.msra.mxu0 %v1003
    %1027 = vmatprep.subr.bf16.mxu0 %v1006
    %1028 = vmatpush1.bf16.msra.mxu0 %v1005
    %1029 = vmatprep.subr.bf16.mxu0 %v1008
    %1030 = vmatpush1.bf16.msra.mxu0 %v1007
    %1031 = vmatprep.subr.bf16.mxu0 %v1010
    %1032 = vmatpush1.bf16.msra.mxu0 %v1009
    %1033 = vmatprep.subr.bf16.mxu0 0
    %1034 = vmatpush1.bf16.msra.mxu0 0
    %1035 = vmatprep.subr.bf16.mxu0 0
    %1036 = vmatpush1.bf16.msra.mxu0 0
    %1037 = vmatprep.subr.bf16.mxu0 0
    %1038 = vmatpush1.bf16.msra.mxu0 0
    %1039 = vmatprep.subr.bf16.mxu0 0
    %1040 = vmatpush1.bf16.msra.mxu0 0
    %1041 = vmatprep.subr.bf16.mxu0 0
    %1042 = vmatpush1.bf16.msra.mxu0 0
    %1043 = vmatprep.subr.bf16.mxu0 0
    %1044 = vmatpush1.bf16.msra.mxu0 0
    %1045 = vmatprep.subr.bf16.mxu0 0
    %1046 = vmatpush1.bf16.msra.mxu0 0
    %1047 = vmatprep.subr.bf16.mxu0 0
    %1048 = vmatpush1.bf16.msra.mxu0 0
    %1049 = vmatprep.subr.bf16.mxu0 0
    %1050 = vmatpush1.bf16.msra.mxu0 0
    %1051 = vmatprep.subr.bf16.mxu0 0
    %1052 = vmatpush1.bf16.msra.mxu0 0
    %1053 = vmatprep.subr.bf16.mxu0 0
    %1054 = vmatpush1.bf16.msra.mxu0 0
    %1055 = vmatprep.subr.bf16.mxu0 0
    %1056 = vmatpush1.bf16.msra.mxu0 0
    %1057 = vmatprep.mubr.bf16.mxu0 0
    %1058 = vmatmul.mubr.bf16.gmra.mrb[0].mxu0 %v1020
    %v1059 = vpop.f32.mrb[0].mxu0
    %v1060 = vadd.f32 %v955, %v1059
    %v1061 = vpop.f32.mrb[0].mxu0
    %v1062 = vadd.f32 %v957, %v1061
    %v1063 = vpop.f32.mrb[0].mxu0
    %v1064 = vadd.f32 %v959, %v1063
    %v1065 = vpop.f32.mrb[0].mxu0
    %v1066 = vadd.f32 %v961, %v1065
    %1067 = vmatprep.mubr.bf16.mxu0 0
    %1068 = vmatmul.mubr.bf16.gmra.mrb[0].mxu0 %v1023
    %v1069 = vpop.f32.mrb[0].mxu0
    %v1070 = vadd.f32 %v965, %v1069
    %v1071 = vpop.f32.mrb[0].mxu0
    %v1072 = vadd.f32 %v967, %v1071
    %v1073 = vpop.f32.mrb[0].mxu0
    %v1074 = vadd.f32 %v969, %v1073
    %v1075 = vpop.f32.mrb[0].mxu0
    %v1076 = vadd.f32 %v971, %v1075
    %1077 = vdwg.mxu0
    %v1078 = vld [vmem:[%s12] sm:$0x3]
    %v1080 = vlaneseq
    %v1081 = vshrl.u32 %v1080, 7
    %v1082 = vsub.s32 0, %v1081
    %v1083 = vrot.slane %v1078, %v1082
    %v1084 = vlaneseq
    %v1085 = vshrl.u32 %v1084, 7
    %v1086 = vsub.s32 1, %v1085
    %v1087 = vrot.slane %v1078, %v1086
    %v1090 = vadd.f32 %v1060, %v1083
    %v1091 = vadd.f32 %v1062, %v1087
    %v1092 = vadd.f32 %v1064, %v1083
    %v1093 = vadd.f32 %v1066, %v1087
    %v1094 = vadd.f32 %v1070, %v1083
    %v1095 = vadd.f32 %v1072, %v1087
    %v1096 = vadd.f32 %v1074, %v1083
    %v1097 = vadd.f32 %v1076, %v1087
    %v1098 = vld [vmem:[#allocation12] sm:$0xff]
    %v1099 = vld [vmem:[#allocation12 + $0x8] sm:$0xff]
    %v1100 = vld [vmem:[#allocation12 + $0x10] sm:$0xff]
    %v1101 = vld [vmem:[#allocation12 + $0x18] sm:$0xff]
    %v1102 = vld [vmem:[#allocation12 + $0x20] sm:$0xff]
    %v1103 = vld [vmem:[#allocation12 + $0x28] sm:$0xff]
    %v1104 = vld [vmem:[#allocation12 + $0x30] sm:$0xff]
    %v1105 = vld [vmem:[#allocation12 + $0x38] sm:$0xff]
    %v1106 = vld [vmem:[%s14] sm:$0x3]
    %v1108 = vlaneseq
    %v1109 = vshrl.u32 %v1108, 7
    %v1110 = vsub.s32 0, %v1109
    %v1111 = vrot.slane %v1106, %v1110
    %v1112 = vlaneseq
    %v1113 = vshrl.u32 %v1112, 7
    %v1114 = vsub.s32 1, %v1113
    %v1115 = vrot.slane %v1106, %v1114
    %v1126 = vunpack.c.l.b16 %v1098
    %v1127 = vunpack.c.h.b16 %v1098
    %v1128 = vunpack.c.l.b16 %v1099
    %v1129 = vunpack.c.h.b16 %v1099
    %v1130 = vunpack.c.l.b16 %v1100
    %v1131 = vunpack.c.h.b16 %v1100
    %v1132 = vunpack.c.l.b16 %v1101
    %v1133 = vunpack.c.h.b16 %v1101
    %v1134 = vunpack.c.l.b16 %v1102
    %v1135 = vunpack.c.h.b16 %v1102
    %v1136 = vunpack.c.l.b16 %v1103
    %v1137 = vunpack.c.h.b16 %v1103
    %v1138 = vunpack.c.l.b16 %v1104
    %v1139 = vunpack.c.h.b16 %v1104
    %v1140 = vunpack.c.l.b16 %v1105
    %v1141 = vunpack.c.h.b16 %v1105
    %v1142 = vpack.c.b16 %v1128, %v1126
    %v1143 = vpack.c.b16 %v1129, %v1127
    %v1144 = vpack.c.b16 %v1132, %v1130
    %v1145 = vpack.c.b16 %v1133, %v1131
    %v1146 = vpack.c.b16 %v1136, %v1134
    %v1147 = vpack.c.b16 %v1137, %v1135
    %v1148 = vpack.c.b16 %v1140, %v1138
    %v1149 = vpack.c.b16 %v1141, %v1139
    %1158 = vmatprep.subr.bf16.mxu0 %v1143
    %1159 = vmatpush1.bf16.msra.mxu0 %v1142
    %1160 = vmatprep.subr.bf16.mxu0 %v1145
    %1161 = vmatpush1.bf16.msra.mxu0 %v1144
    %1162 = vmatprep.subr.bf16.mxu0 %v1147
    %1163 = vmatpush1.bf16.msra.mxu0 %v1146
    %1164 = vmatprep.subr.bf16.mxu0 %v1149
    %1165 = vmatpush1.bf16.msra.mxu0 %v1148
    %1166 = vmatprep.subr.bf16.mxu0 0
    %1167 = vmatpush1.bf16.msra.mxu0 0
    %1168 = vmatprep.subr.bf16.mxu0 0
    %1169 = vmatpush1.bf16.msra.mxu0 0
    %1170 = vmatprep.subr.bf16.mxu0 0
    %1171 = vmatpush1.bf16.msra.mxu0 0
    %1172 = vmatprep.subr.bf16.mxu0 0
    %1173 = vmatpush1.bf16.msra.mxu0 0
    %1174 = vmatprep.subr.bf16.mxu0 0
    %1175 = vmatpush1.bf16.msra.mxu0 0
    %1176 = vmatprep.subr.bf16.mxu0 0
    %1177 = vmatpush1.bf16.msra.mxu0 0
    %1178 = vmatprep.subr.bf16.mxu0 0
    %1179 = vmatpush1.bf16.msra.mxu0 0
    %1180 = vmatprep.subr.bf16.mxu0 0
    %1181 = vmatpush1.bf16.msra.mxu0 0
    %1182 = vmatprep.subr.bf16.mxu0 0
    %1183 = vmatpush1.bf16.msra.mxu0 0
    %1184 = vmatprep.subr.bf16.mxu0 0
    %1185 = vmatpush1.bf16.msra.mxu0 0
    %1186 = vmatprep.subr.bf16.mxu0 0
    %1187 = vmatpush1.bf16.msra.mxu0 0
    %1188 = vmatprep.subr.bf16.mxu0 0
    %1189 = vmatpush1.bf16.msra.mxu0 0
    %1190 = vmatprep.mubr.bf16.mxu0 0
    %1191 = vmatmul.mubr.bf16.gmra.mrb[0].mxu0 %v597
    %v1192 = vpop.f32.mrb[0].mxu0
    %v1193 = vadd.f32 %v1111, %v1192
    %v1194 = vpop.f32.mrb[0].mxu0
    %v1195 = vadd.f32 %v1115, %v1194
    %v1196 = vpop.f32.mrb[0].mxu0
    %v1197 = vpop.f32.mrb[0].mxu0
    %1198 = vdwg.mxu0
    %v1199 = vadd.f32 %v1090, %v1193
    %v1200 = vmul.f32 %v1199, 0.5
    %v1201 = vtanh.pop %v1200
    %v1202 = vadd.f32 %v1201, 1.0
    %v1203 = vmul.f32 %v1202, 0.5
    %v1204 = vmul.f32 %v1203, %v1195
    %v1205 = vadd.f32 %v1091, %v1204
    %v1206 = vtanh.pop %v1205
    %v1207 = vsub.f32 1.0, %v1203
    %1209 = vrot.lane.b32.xlu0 %v1206, 64
    %v1210 = vpop.permute.xlu0 %1209
    %v1212 = vmul.f32 %v1207, %v1210
    %v1213 = vmul.f32 %v1203, 0.0
    %v1214 = vadd.f32 %v1212, %v1213
    %v1215 = vpack.c.bf16 %v1214, %v1214
    %1217 = vrot.lane.b32.xlu0 %v1215, 64
    %v1218 = vpop.permute.xlu0 %1217
    %v1220 = vsel %vm595, %v1218, 0
    %1222 = vmatprep.subr.bf16.mxu0 %v1143
    %1223 = vmatpush1.bf16.msra.mxu0 %v1142
    %1224 = vmatprep.subr.bf16.mxu0 %v1145
    %1225 = vmatpush1.bf16.msra.mxu0 %v1144
    %1226 = vmatprep.subr.bf16.mxu0 %v1147
    %1227 = vmatpush1.bf16.msra.mxu0 %v1146
    %1228 = vmatprep.subr.bf16.mxu0 %v1149
    %1229 = vmatpush1.bf16.msra.mxu0 %v1148
    %1230 = vmatprep.subr.bf16.mxu0 0
    %1231 = vmatpush1.bf16.msra.mxu0 0
    %1232 = vmatprep.subr.bf16.mxu0 0
    %1233 = vmatpush1.bf16.msra.mxu0 0
    %1234 = vmatprep.subr.bf16.mxu0 0
    %1235 = vmatpush1.bf16.msra.mxu0 0
    %1236 = vmatprep.subr.bf16.mxu0 0
    %1237 = vmatpush1.bf16.msra.mxu0 0
    %1238 = vmatprep.subr.bf16.mxu0 0
    %1239 = vmatpush1.bf16.msra.mxu0 0
    %1240 = vmatprep.subr.bf16.mxu0 0
    %1241 = vmatpush1.bf16.msra.mxu0 0
    %1242 = vmatprep.subr.bf16.mxu0 0
    %1243 = vmatpush1.bf16.msra.mxu0 0
    %1244 = vmatprep.subr.bf16.mxu0 0
    %1245 = vmatpush1.bf16.msra.mxu0 0
    %1246 = vmatprep.subr.bf16.mxu0 0
    %1247 = vmatpush1.bf16.msra.mxu0 0
    %1248 = vmatprep.subr.bf16.mxu0 0
    %1249 = vmatpush1.bf16.msra.mxu0 0
    %1250 = vmatprep.subr.bf16.mxu0 0
    %1251 = vmatpush1.bf16.msra.mxu0 0
    %1252 = vmatprep.subr.bf16.mxu0 0
    %1253 = vmatpush1.bf16.msra.mxu0 0
    %1254 = vmatprep.mubr.bf16.mxu0 0
    %1255 = vmatmul.mubr.bf16.gmra.mrb[0].mxu0 %v1220
    %v1256 = vpop.f32.mrb[0].mxu0
    %v1257 = vadd.f32 %v1111, %v1256
    %v1258 = vpop.f32.mrb[0].mxu0
    %v1259 = vadd.f32 %v1115, %v1258
    %v1260 = vpop.f32.mrb[0].mxu0
    %v1261 = vpop.f32.mrb[0].mxu0
    %1262 = vdwg.mxu0
    %v1263 = vadd.f32 %v1092, %v1257
    %v1264 = vmul.f32 %v1263, 0.5
    %v1265 = vtanh.pop %v1264
    %v1266 = vadd.f32 %v1265, 1.0
    %v1267 = vmul.f32 %v1266, 0.5
    %v1268 = vmul.f32 %v1267, %v1259
    %v1269 = vadd.f32 %v1093, %v1268
    %v1270 = vtanh.pop %v1269
    %v1271 = vsub.f32 1.0, %v1267
    %1273 = vrot.lane.b32.xlu0 %v1270, 64
    %v1274 = vpop.permute.xlu0 %1273
    %v1276 = vmul.f32 %v1271, %v1274
    %v1277 = vmul.f32 %v1267, %v1214
    %v1278 = vadd.f32 %v1276, %v1277
    %v1279 = vpack.c.bf16 %v1278, %v1278
    %1281 = vrot.lane.b32.xlu0 %v1279, 64
    %v1282 = vpop.permute.xlu0 %1281
    %v1284 = vsel %vm595, %v1282, 0
    %1286 = vmatprep.subr.bf16.mxu0 %v1143
    %1287 = vmatpush1.bf16.msra.mxu0 %v1142
    %1288 = vmatprep.subr.bf16.mxu0 %v1145
    %1289 = vmatpush1.bf16.msra.mxu0 %v1144
    %1290 = vmatprep.subr.bf16.mxu0 %v1147
    %1291 = vmatpush1.bf16.msra.mxu0 %v1146
    %1292 = vmatprep.subr.bf16.mxu0 %v1149
    %1293 = vmatpush1.bf16.msra.mxu0 %v1148
    %1294 = vmatprep.subr.bf16.mxu0 0
    %1295 = vmatpush1.bf16.msra.mxu0 0
    %1296 = vmatprep.subr.bf16.mxu0 0
    %1297 = vmatpush1.bf16.msra.mxu0 0
    %1298 = vmatprep.subr.bf16.mxu0 0
    %1299 = vmatpush1.bf16.msra.mxu0 0
    %1300 = vmatprep.subr.bf16.mxu0 0
    %1301 = vmatpush1.bf16.msra.mxu0 0
    %1302 = vmatprep.subr.bf16.mxu0 0
    %1303 = vmatpush1.bf16.msra.mxu0 0
    %1304 = vmatprep.subr.bf16.mxu0 0
    %1305 = vmatpush1.bf16.msra.mxu0 0
    %1306 = vmatprep.subr.bf16.mxu0 0
    %1307 = vmatpush1.bf16.msra.mxu0 0
    %1308 = vmatprep.subr.bf16.mxu0 0
    %1309 = vmatpush1.bf16.msra.mxu0 0
    %1310 = vmatprep.subr.bf16.mxu0 0
    %1311 = vmatpush1.bf16.msra.mxu0 0
    %1312 = vmatprep.subr.bf16.mxu0 0
    %1313 = vmatpush1.bf16.msra.mxu0 0
    %1314 = vmatprep.subr.bf16.mxu0 0
    %1315 = vmatpush1.bf16.msra.mxu0 0
    %1316 = vmatprep.subr.bf16.mxu0 0
    %1317 = vmatpush1.bf16.msra.mxu0 0
    %1318 = vmatprep.mubr.bf16.mxu0 0
    %1319 = vmatmul.mubr.bf16.gmra.mrb[0].mxu0 %v1284
    %v1320 = vpop.f32.mrb[0].mxu0
    %v1321 = vadd.f32 %v1111, %v1320
    %v1322 = vpop.f32.mrb[0].mxu0
    %v1323 = vadd.f32 %v1115, %v1322
    %v1324 = vpop.f32.mrb[0].mxu0
    %v1325 = vpop.f32.mrb[0].mxu0
    %1326 = vdwg.mxu0
    %v1327 = vadd.f32 %v1094, %v1321
    %v1328 = vmul.f32 %v1327, 0.5
    %v1329 = vtanh.pop %v1328
    %v1330 = vadd.f32 %v1329, 1.0
    %v1331 = vmul.f32 %v1330, 0.5
    %v1332 = vmul.f32 %v1331, %v1323
    %v1333 = vadd.f32 %v1095, %v1332
    %v1334 = vtanh.pop %v1333
    %v1335 = vsub.f32 1.0, %v1331
    %1337 = vrot.lane.b32.xlu0 %v1334, 64
    %v1338 = vpop.permute.xlu0 %1337
    %v1340 = vmul.f32 %v1335, %v1338
    %v1341 = vmul.f32 %v1331, %v1278
    %v1342 = vadd.f32 %v1340, %v1341
    %v1343 = vpack.c.bf16 %v1342, %v1342
    %1345 = vrot.lane.b32.xlu0 %v1343, 64
    %v1346 = vpop.permute.xlu0 %1345
    %v1348 = vsel %vm595, %v1346, 0
    %1350 = vmatprep.subr.bf16.mxu0 %v1143
    %1351 = vmatpush1.bf16.msra.mxu0 %v1142
    %1352 = vmatprep.subr.bf16.mxu0 %v1145
    %1353 = vmatpush1.bf16.msra.mxu0 %v1144
    %1354 = vmatprep.subr.bf16.mxu0 %v1147
    %1355 = vmatpush1.bf16.msra.mxu0 %v1146
    %1356 = vmatprep.subr.bf16.mxu0 %v1149
    %1357 = vmatpush1.bf16.msra.mxu0 %v1148
    %1358 = vmatprep.subr.bf16.mxu0 0
    %1359 = vmatpush1.bf16.msra.mxu0 0
    %1360 = vmatprep.subr.bf16.mxu0 0
    %1361 = vmatpush1.bf16.msra.mxu0 0
    %1362 = vmatprep.subr.bf16.mxu0 0
    %1363 = vmatpush1.bf16.msra.mxu0 0
    %1364 = vmatprep.subr.bf16.mxu0 0
    %1365 = vmatpush1.bf16.msra.mxu0 0
    %1366 = vmatprep.subr.bf16.mxu0 0
    %1367 = vmatpush1.bf16.msra.mxu0 0
    %1368 = vmatprep.subr.bf16.mxu0 0
    %1369 = vmatpush1.bf16.msra.mxu0 0
    %1370 = vmatprep.subr.bf16.mxu0 0
    %1371 = vmatpush1.bf16.msra.mxu0 0
    %1372 = vmatprep.subr.bf16.mxu0 0
    %1373 = vmatpush1.bf16.msra.mxu0 0
    %1374 = vmatprep.subr.bf16.mxu0 0
    %1375 = vmatpush1.bf16.msra.mxu0 0
    %1376 = vmatprep.subr.bf16.mxu0 0
    %1377 = vmatpush1.bf16.msra.mxu0 0
    %1378 = vmatprep.subr.bf16.mxu0 0
    %1379 = vmatpush1.bf16.msra.mxu0 0
    %1380 = vmatprep.subr.bf16.mxu0 0
    %1381 = vmatpush1.bf16.msra.mxu0 0
    %1382 = vmatprep.mubr.bf16.mxu0 0
    %1383 = vmatmul.mubr.bf16.gmra.mrb[0].mxu0 %v1348
    %v1384 = vpop.f32.mrb[0].mxu0
    %v1385 = vadd.f32 %v1111, %v1384
    %v1386 = vpop.f32.mrb[0].mxu0
    %v1387 = vadd.f32 %v1115, %v1386
    %v1388 = vpop.f32.mrb[0].mxu0
    %v1389 = vpop.f32.mrb[0].mxu0
    %1390 = vdwg.mxu0
    %v1391 = vadd.f32 %v1096, %v1385
    %v1392 = vmul.f32 %v1391, 0.5
    %v1393 = vtanh.pop %v1392
    %v1394 = vadd.f32 %v1393, 1.0
    %v1395 = vmul.f32 %v1394, 0.5
    %v1396 = vmul.f32 %v1395, %v1387
    %v1397 = vadd.f32 %v1097, %v1396
    %v1398 = vtanh.pop %v1397
    %v1399 = vsub.f32 1.0, %v1395
    %1401 = vrot.lane.b32.xlu0 %v1398, 64
    %v1402 = vpop.permute.xlu0 %1401
    %v1404 = vmul.f32 %v1399, %v1402
    %v1405 = vmul.f32 %v1395, %v1342
    %v1406 = vadd.f32 %v1404, %v1405
    %v1407 = vld [vmem:[%s15] sm:$0xff]
    %v1408 = vld [vmem:[%s15 + $0x8] sm:$0xff]
    %v1409 = vld [vmem:[%s15 + $0x10] sm:$0xff]
    %v1410 = vld [vmem:[%s15 + $0x18] sm:$0xff]
    %v1411 = vld [vmem:[%s15 + $0x20] sm:$0xff]
    %v1412 = vld [vmem:[%s15 + $0x28] sm:$0xff]
    %v1413 = vld [vmem:[%s15 + $0x30] sm:$0xff]
    %v1414 = vld [vmem:[%s15 + $0x38] sm:$0xff]
    %v1415 = vld [vmem:[%s16] sm:$0xff]
    %v1416 = vld [vmem:[%s16 + $0x8] sm:$0xff]
    %v1417 = vld [vmem:[%s16 + $0x10] sm:$0xff]
    %v1418 = vld [vmem:[%s16 + $0x18] sm:$0xff]
    %v1419 = vld [vmem:[%s16 + $0x20] sm:$0xff]
    %v1420 = vld [vmem:[%s16 + $0x28] sm:$0xff]
    %v1421 = vld [vmem:[%s16 + $0x30] sm:$0xff]
    %v1422 = vld [vmem:[%s16 + $0x38] sm:$0xff]
    %1427 = vrot.lane.b32.xlu0 %v1406, 64
    %v1428 = vpop.permute.xlu0 %1427
    %1429 = vrot.lane.b32.xlu0 %v1342, 64
    %v1430 = vpop.permute.xlu0 %1429
    %1431 = vrot.lane.b32.xlu0 %v1278, 64
    %v1432 = vpop.permute.xlu0 %1431
    %1433 = vrot.lane.b32.xlu0 %v1214, 64
    %v1434 = vpop.permute.xlu0 %1433
    %v1435 = vsel %vm595, %v1428, 0
    %v1437 = vsel %vm595, %v1430, 0
    %v1439 = vsel %vm595, %v1432, 0
    %v1441 = vsel %vm595, %v1434, 0
    %1443 = vmatprep.subr.mxu0 0.0
    %1444 = vmatpush1.msra.mxu0 %v1415
    %1445 = vmatprep.subr.mxu0 0.0
    %1446 = vmatpush1.msra.mxu0 %v1416
    %1447 = vmatprep.subr.mxu0 0.0
    %1448 = vmatpush1.msra.mxu0 %v1417
    %1449 = vmatprep.subr.mxu0 0.0
    %1450 = vmatpush1.msra.mxu0 %v1418
    %1451 = vmatprep.subr.mxu0 0.0
    %1452 = vmatpush1.msra.mxu0 %v1419
    %1453 = vmatprep.subr.mxu0 0.0
    %1454 = vmatpush1.msra.mxu0 %v1420
    %1455 = vmatprep.subr.mxu0 0.0
    %1456 = vmatpush1.msra.mxu0 %v1421
    %1457 = vmatprep.subr.mxu0 0.0
    %1458 = vmatpush1.msra.mxu0 %v1422
    %1459 = vmatprep.subr.mxu0 0.0
    %1460 = vmatpush1.msra.mxu0 0.0
    %1461 = vmatprep.subr.mxu0 0.0
    %1462 = vmatpush1.msra.mxu0 0.0
    %1463 = vmatprep.subr.mxu0 0.0
    %1464 = vmatpush1.msra.mxu0 0.0
    %1465 = vmatprep.subr.mxu0 0.0
    %1466 = vmatpush1.msra.mxu0 0.0
    %1467 = vmatprep.subr.mxu0 0.0
    %1468 = vmatpush1.msra.mxu0 0.0
    %1469 = vmatprep.subr.mxu0 0.0
    %1470 = vmatpush1.msra.mxu0 0.0
    %1471 = vmatprep.subr.mxu0 0.0
    %1472 = vmatpush1.msra.mxu0 0.0
    %1473 = vmatprep.subr.mxu0 0.0
    %1474 = vmatpush1.msra.mxu0 0.0
    %1475 = vmatprep.subr.mxu0 0.0
    %1476 = vmatpush1.msra.mxu0 0.0
    %1477 = vmatprep.subr.mxu0 0.0
    %1478 = vmatpush1.msra.mxu0 0.0
    %1479 = vmatprep.subr.mxu0 0.0
    %1480 = vmatpush1.msra.mxu0 0.0
    %1481 = vmatprep.subr.mxu0 0.0
    %1482 = vmatpush1.msra.mxu0 0.0
    %1483 = vmatprep.subr.mxu0 0.0
    %1484 = vmatpush1.msra.mxu0 0.0
    %1485 = vmatprep.subr.mxu0 0.0
    %1486 = vmatpush1.msra.mxu0 0.0
    %1487 = vmatprep.subr.mxu0 0.0
    %1488 = vmatpush1.msra.mxu0 0.0
    %1489 = vmatprep.subr.mxu0 0.0
    %1490 = vmatpush1.msra.mxu0 0.0
    %1491 = vmatprep.subr.mxu0 0.0
    %1492 = vmatpush1.msra.mxu0 0.0
    %1493 = vmatprep.subr.mxu0 0.0
    %1494 = vmatpush1.msra.mxu0 0.0
    %1495 = vmatprep.subr.mxu0 0.0
    %1496 = vmatpush1.msra.mxu0 0.0
    %1497 = vmatprep.subr.mxu0 0.0
    %1498 = vmatpush1.msra.mxu0 0.0
    %1499 = vmatprep.subr.mxu0 0.0
    %1500 = vmatpush1.msra.mxu0 0.0
    %1501 = vmatprep.subr.mxu0 0.0
    %1502 = vmatpush1.msra.mxu0 0.0
    %1503 = vmatprep.subr.mxu0 0.0
    %1504 = vmatpush1.msra.mxu0 0.0
    %1505 = vmatprep.subr.mxu0 0.0
    %1506 = vmatpush1.msra.mxu0 0.0
    %1507 = vmatprep.mubr.f32.mxu0 0.0
    %1508 = vmatmul.mubr.f32.gmra.mrb[0].mxu0 %v1435
    %v1509 = vpop.f32.mrb[0].mxu0
    %v1510 = vadd.f32 0.0, %v1509
    %v1511 = vpop.f32.mrb[0].mxu0
    %1512 = vmatprep.mubr.f32.mxu0 0.0
    %1513 = vmatmul.mubr.f32.gmra.mrb[0].mxu0 %v1437
    %v1514 = vpop.f32.mrb[0].mxu0
    %v1515 = vadd.f32 0.0, %v1514
    %v1516 = vpop.f32.mrb[0].mxu0
    %1517 = vmatprep.mubr.f32.mxu0 0.0
    %1518 = vmatmul.mubr.f32.gmra.mrb[0].mxu0 %v1439
    %v1519 = vpop.f32.mrb[0].mxu0
    %v1520 = vadd.f32 0.0, %v1519
    %v1521 = vpop.f32.mrb[0].mxu0
    %1522 = vmatprep.mubr.f32.mxu0 0.0
    %1523 = vmatmul.mubr.f32.gmra.mrb[0].mxu0 %v1441
    %v1524 = vpop.f32.mrb[0].mxu0
    %v1525 = vadd.f32 0.0, %v1524
    %v1526 = vpop.f32.mrb[0].mxu0
    %1527 = vdwg.mxu0
    %1528 = vmatprep.subr.mxu0 0.0
    %1529 = vmatpush1.msra.mxu0 %v1407
    %1530 = vmatprep.subr.mxu0 0.0
    %1531 = vmatpush1.msra.mxu0 %v1408
    %1532 = vmatprep.subr.mxu0 0.0
    %1533 = vmatpush1.msra.mxu0 %v1409
    %1534 = vmatprep.subr.mxu0 0.0
    %1535 = vmatpush1.msra.mxu0 %v1410
    %1536 = vmatprep.subr.mxu0 0.0
    %1537 = vmatpush1.msra.mxu0 %v1411
    %1538 = vmatprep.subr.mxu0 0.0
    %1539 = vmatpush1.msra.mxu0 %v1412
    %1540 = vmatprep.subr.mxu0 0.0
    %1541 = vmatpush1.msra.mxu0 %v1413
    %1542 = vmatprep.subr.mxu0 0.0
    %1543 = vmatpush1.msra.mxu0 %v1414
    %1544 = vmatprep.subr.mxu0 0.0
    %1545 = vmatpush1.msra.mxu0 0.0
    %1546 = vmatprep.subr.mxu0 0.0
    %1547 = vmatpush1.msra.mxu0 0.0
    %1548 = vmatprep.subr.mxu0 0.0
    %1549 = vmatpush1.msra.mxu0 0.0
    %1550 = vmatprep.subr.mxu0 0.0
    %1551 = vmatpush1.msra.mxu0 0.0
    %1552 = vmatprep.subr.mxu0 0.0
    %1553 = vmatpush1.msra.mxu0 0.0
    %1554 = vmatprep.subr.mxu0 0.0
    %1555 = vmatpush1.msra.mxu0 0.0
    %1556 = vmatprep.subr.mxu0 0.0
    %1557 = vmatpush1.msra.mxu0 0.0
    %1558 = vmatprep.subr.mxu0 0.0
    %1559 = vmatpush1.msra.mxu0 0.0
    %1560 = vmatprep.subr.mxu0 0.0
    %1561 = vmatpush1.msra.mxu0 0.0
    %1562 = vmatprep.subr.mxu0 0.0
    %1563 = vmatpush1.msra.mxu0 0.0
    %1564 = vmatprep.subr.mxu0 0.0
    %1565 = vmatpush1.msra.mxu0 0.0
    %1566 = vmatprep.subr.mxu0 0.0
    %1567 = vmatpush1.msra.mxu0 0.0
    %1568 = vmatprep.subr.mxu0 0.0
    %1569 = vmatpush1.msra.mxu0 0.0
    %1570 = vmatprep.subr.mxu0 0.0
    %1571 = vmatpush1.msra.mxu0 0.0
    %1572 = vmatprep.subr.mxu0 0.0
    %1573 = vmatpush1.msra.mxu0 0.0
    %1574 = vmatprep.subr.mxu0 0.0
    %1575 = vmatpush1.msra.mxu0 0.0
    %1576 = vmatprep.subr.mxu0 0.0
    %1577 = vmatpush1.msra.mxu0 0.0
    %1578 = vmatprep.subr.mxu0 0.0
    %1579 = vmatpush1.msra.mxu0 0.0
    %1580 = vmatprep.subr.mxu0 0.0
    %1581 = vmatpush1.msra.mxu0 0.0
    %1582 = vmatprep.subr.mxu0 0.0
    %1583 = vmatpush1.msra.mxu0 0.0
    %1584 = vmatprep.subr.mxu0 0.0
    %1585 = vmatpush1.msra.mxu0 0.0
    %1586 = vmatprep.subr.mxu0 0.0
    %1587 = vmatpush1.msra.mxu0 0.0
    %1588 = vmatprep.subr.mxu0 0.0
    %1589 = vmatpush1.msra.mxu0 0.0
    %1590 = vmatprep.subr.mxu0 0.0
    %1591 = vmatpush1.msra.mxu0 0.0
    %1592 = vmatprep.mubr.f32.mxu0 0.0
    %1593 = vmatmul.mubr.f32.gmra.mrb[0].mxu0 %v1441
    %v1594 = vpop.f32.mrb[0].mxu0
    %v1595 = vadd.f32 %v1510, %v1594
    %v1596 = vpop.f32.mrb[0].mxu0
    %1597 = vmatprep.mubr.f32.mxu0 0.0
    %1598 = vmatmul.mubr.f32.gmra.mrb[0].mxu0 %v1439
    %v1599 = vpop.f32.mrb[0].mxu0
    %v1600 = vadd.f32 %v1515, %v1599
    %v1601 = vpop.f32.mrb[0].mxu0
    %1602 = vmatprep.mubr.f32.mxu0 0.0
    %1603 = vmatmul.mubr.f32.gmra.mrb[0].mxu0 %v1437
    %v1604 = vpop.f32.mrb[0].mxu0
    %v1605 = vadd.f32 %v1520, %v1604
    %v1606 = vpop.f32.mrb[0].mxu0
    %1607 = vmatprep.mubr.f32.mxu0 0.0
    %1608 = vmatmul.mubr.f32.gmra.mrb[0].mxu0 %v1435
    %v1609 = vpop.f32.mrb[0].mxu0
    %v1610 = vadd.f32 %v1525, %v1609
    %v1611 = vpop.f32.mrb[0].mxu0
    %1612 = vdwg.mxu0
    %v1613 = vlaneseq
    %v1614 = vand.u32 %v1613, 127
    %vm1615 = vcmp.eq.s32.totalorder %v1614, 0
    %v1616 = vsel %vm1615, 1, 0
    %v1617 = vcvt.s32.f32 %v1616
    %v1618 = vmul.f32 %v1595, %v1617
    %v1619 = vadd.f32 %v1618, 0.0
    %vm1620 = vcmp.eq.s32.totalorder %v1614, 1
    %v1621 = vsel %vm1620, 1, 0
    %v1622 = vcvt.s32.f32 %v1621
    %v1623 = vmul.f32 %v1600, %v1622
    %v1624 = vadd.f32 %v1619, %v1623
    %vm1625 = vcmp.eq.s32.totalorder %v1614, 2
    %v1626 = vsel %vm1625, 1, 0
    %v1627 = vcvt.s32.f32 %v1626
    %v1628 = vmul.f32 %v1605, %v1627
    %v1629 = vadd.f32 %v1624, %v1628
    %vm1630 = vcmp.eq.s32.totalorder %v1614, 3
    %v1631 = vsel %vm1630, 1, 0
    %v1632 = vcvt.s32.f32 %v1631
    %v1633 = vmul.f32 %v1610, %v1632
    %v1634 = vadd.f32 %v1629, %v1633
    %v1635 = vld [vmem:[%s17] sm:$0x1]
    %v1637 = vlaneseq
    %v1638 = vshrl.u32 %v1637, 7
    %v1639 = vsub.s32 0, %v1638
    %v1640 = vrot.slane %v1635, %v1639
    %v1642 = vadd.f32 %v1634, %v1640
    %v1643 = vtanh.pop %v1642
    %v1644 = vmul.f32 %v1643, 2.0
    %vm1645 = vcmask 31744
    %1646 = vst.msk [vmem:[%s18] sm:$0xff] %vm1645, %v1644
    // Predicated region
    $region102: #{tpu_custom_call.1} parent=1 // pred_check
      _
    $region103: #{tpu_custom_call.1} parent=1 // pred_check_branch
      %1648 = sbr.rel (0) target = $region105
    $region104: #{tpu_custom_call.1} parent=1 // pred_region
      _
    $region105: #{tpu_custom_call.1} parent=1 // pred_fallthru
      _
    // Predicated region
    $region106: #{tpu_custom_call.1} parent=1 // pred_check
      _
    $region107: #{tpu_custom_call.1} parent=1 // pred_check_branch
      %1650 = sbr.rel (0) target = $region109
    $region108: #{tpu_custom_call.1} parent=1 // pred_region
      _
    $region109: #{tpu_custom_call.1} parent=1 // pred_fallthru
      _
    %1651 = vsyncpa [#allocation3], 1
    %1652 = vsyncpa [#allocation5], 1
    %1653 = vsyncpa [#allocation8], 1
    %1654 = vsyncpa [#allocation11], 1

</llo_original>
